<compile_context>
chip_gen: v7x
topology: tpu7x:2x2x1
jax: 0.10.0
libtpu: 0.0.40
codegen_flags: <defaults>
</compile_context>

<pallas_src>
import jax
import jax.numpy as jnp
import numpy as np
from jax import lax
from jax.experimental import pallas as pl
from jax.experimental.pallas import tpu as pltpu

KSIZE = 7
PAD = 3
TB = 2          # batch items processed per grid step


def _fused_gate(plane_ref, b_ref, const, oh):
    """One SpatialGate (conv7x7 + BN + SiLU) for all TB batch items as a single MXU matmul.

    plane_ref: (TB, oh + 2*PAD, 2*ow) bf16 scratch; lanes [0,ow) = max-pool, [ow,2*ow) =
               sum-pool, with a zeroed PAD-row halo top and bottom.
    b_ref:     (KSIZE*2*ow, ow) bf16 banded conv matrix (BN scale and 1/n_pool folded in,
               lane-direction "same" padding absorbed by clipping the bands).
    const:     f32 scalar = folded conv bias + BN shift.
    Returns (TB*oh, ow) f32 = (1/3) * silu(BN(conv(zpool))).
    """
    rows = []
    for tb in range(TB):
        rows.append(jnp.concatenate(
            [plane_ref[tb, i:i + oh, :] for i in range(KSIZE)], axis=1))
    lhs = jnp.concatenate(rows, axis=0)                        # (TB*oh, 14*ow) bf16
    acc = jnp.dot(lhs, b_ref[...], preferred_element_type=jnp.float32) + const
    return acc * jax.nn.sigmoid(acc) * (1.0 / 3.0)


def triplet_kernel(x_ref, b1_ref, b2_ref, b3_ref, t1_ref, t2b_ref, s_ref, c_ref,
                   out_ref, pl1_ref, pl2_ref, pl3_ref):
    _, C, H, W = x_ref.shape

    # Zero only the conv halo rows, once: scratch persists across grid steps and the interior
    # rows are fully overwritten every step.
    @pl.when(pl.program_id(0) == 0)
    def _():
        for ref, oh in ((pl1_ref, C), (pl2_ref, C), (pl3_ref, H)):
            lanes = ref.shape[2]
            ref[:, 0:PAD, :] = jnp.zeros((TB, PAD, lanes), ref.dtype)
            ref[:, PAD + oh:PAD + oh + PAD, :] = jnp.zeros((TB, PAD, lanes), ref.dtype)

    x = x_ref[...]                                             # (TB, C, H, W) f32
    bf = pl1_ref.dtype

    # ---- channel pools (mean realized as sum; 1/n folded into the banded taps) ----
    # height_gate: pool over H -> (C, W) plane
    pl1_ref[:, PAD:PAD + C, 0:W]     = jnp.max(x, axis=2).astype(bf)
    pl1_ref[:, PAD:PAD + C, W:2 * W] = jnp.sum(x, axis=2).astype(bf)
    # width_gate: pool over W -> (C, H) plane (conv taps spatially transposed in the wrapper)
    pl2_ref[:, PAD:PAD + C, 0:H]     = jnp.max(x, axis=3).astype(bf)
    pl2_ref[:, PAD:PAD + C, H:2 * H] = jnp.sum(x, axis=3).astype(bf)
    # spatial_gate: pool over C -> (H, W) plane
    pl3_ref[:, PAD:PAD + H, 0:W]     = jnp.max(x, axis=1).astype(bf)
    pl3_ref[:, PAD:PAD + H, W:2 * W] = jnp.sum(x, axis=1).astype(bf)

    g1 = _fused_gate(pl1_ref, b1_ref, c_ref[0], C)             # (TB*C, W), 1/3 folded in
    g2 = _fused_gate(pl2_ref, b2_ref, c_ref[1], C)             # (TB*C, H)
    g3 = _fused_gate(pl3_ref, b3_ref, c_ref[2], H)             # (TB*H, W)

    # ---- lane-dense combine, all on the MXU ----
    # out[tb*C + c, h*W + w] = g1[tb*C+c, w] + g2[tb*C+c, h] + g3[tb*H+h, w]
    #   t1:  (W, HW)      tiled identity   t1[w', h*W+w]        = [w'==w]
    #   t2b: (TB*H, HW)   block ones       t2b[tb*H+h', h*W+w]  = [h'==h]
    #   s:   (TB*C, TB*H) block-diag ones  s[tb*C+c, tb'*H+h']  = [tb==tb']
    t1 = t1_ref[...]
    o1 = jnp.dot(g1.astype(bf), t1, preferred_element_type=jnp.float32)
    o2 = jnp.dot(g2.astype(bf), t2b_ref[0:H, :], preferred_element_type=jnp.float32)
    g3f = jnp.dot(g3.astype(bf), t1, preferred_element_type=jnp.float32)     # (TB*H, HW)
    masked = t2b_ref[...] * g3f.astype(bf)                     # exact: g3f copies bf16 values
    o3 = jnp.dot(s_ref[...], masked, preferred_element_type=jnp.float32)     # (TB*C, HW)
    out_ref[...] = o1 + o2 + o3                                # full (8, 256) unmasked store


def triplet_attention(x, b1, b2, b3, t1, t2b, s_mat, consts):
    B, C, H, W = x.shape
    assert B % TB == 0, "batch must be a multiple of TB"
    HW = H * W
    steps = B // TB
    grid_spec = pltpu.PrefetchScalarGridSpec(
        num_scalar_prefetch=0,
        grid=(steps,),
        in_specs=[
            pl.BlockSpec((TB, C, H, W), lambda b: (b, 0, 0, 0)),
            pl.BlockSpec(b1.shape, lambda b: (0, 0)),           # grid-invariant constants
            pl.BlockSpec(b2.shape, lambda b: (0, 0)),
            pl.BlockSpec(b3.shape, lambda b: (0, 0)),
            pl.BlockSpec(t1.shape, lambda b: (0, 0)),
            pl.BlockSpec(t2b.shape, lambda b: (0, 0)),
            pl.BlockSpec(s_mat.shape, lambda b: (0, 0)),
            pl.BlockSpec(memory_space=pltpu.MemorySpace.SMEM),
        ],
        out_specs=pl.BlockSpec((TB * C, HW), lambda b: (b, 0)),
        scratch_shapes=[
            pltpu.VMEM((TB, C + 2 * PAD, 2 * W), jnp.bfloat16),  # gate1 fused max|sum plane
            pltpu.VMEM((TB, C + 2 * PAD, 2 * H), jnp.bfloat16),  # gate2 fused plane
            pltpu.VMEM((TB, H + 2 * PAD, 2 * W), jnp.bfloat16),  # gate3 fused plane
        ],
    )
    gate_flops = (2 * (TB * C) * (2 * KSIZE * W) * W
                  + 2 * (TB * C) * (2 * KSIZE * H) * H
                  + 2 * (TB * H) * (2 * KSIZE * W) * W)
    combine_flops = (2 * (TB * C) * W * HW + 2 * (TB * C) * H * HW
                     + 2 * (TB * H) * W * HW + 2 * (TB * C) * (TB * H) * HW)
    flops = int(steps * (gate_flops + combine_flops + 10 * TB * C * HW))
    transcendentals = int(steps * (TB * C * W + TB * C * H + TB * H * W))
    bytes_accessed = int((x.size + B * C * HW) * 4
                         + (b1.size + b2.size + b3.size + t1.size + t2b.size + s_mat.size) * 2)
    out_flat = pl.pallas_call(
        triplet_kernel,
        grid_spec=grid_spec,
        out_shape=jax.ShapeDtypeStruct((B * C, HW), jnp.float32),
        compiler_params=pltpu.CompilerParams(
            dimension_semantics=("arbitrary",),    # one coarse step; keep it on one TensorCore
            vmem_limit_bytes=4 * 1024 * 1024,
        ),
        cost_estimate=pl.CostEstimate(flops=flops, transcendentals=transcendentals,
                                      bytes_accessed=bytes_accessed),
    )(x, b1, b2, b3, t1, t2b, s_mat, consts)
    # (B*C, H*W) row-major == (B, C, H, W): free metadata reshape.
    return out_flat.reshape(B, C, H, W)


# ----------------------- parameter setup (deterministic) -----------------------

def init_gate(key):
    kw, kb = jax.random.split(key)
    return dict(
        w=jax.random.normal(kw, (1, 2, 7, 7), jnp.float32) * 0.1,   # Conv2d(2->1, k=7, p=3)
        b=jax.random.normal(kb, (1,), jnp.float32) * 0.1,
        gamma=jnp.full((1,), 1.1, jnp.float32),                      # BatchNorm2d(1)
        beta=jnp.full((1,), 0.05, jnp.float32),
        rmean=jnp.full((1,), 0.02, jnp.float32),
        rvar=jnp.full((1,), 0.9, jnp.float32),
        eps=1e-5,
    )


def fold_gate_banded(p, n_pool, ow, transpose_hw=False):
    """Fold conv7x7 + inference-mode BN into a single (KSIZE*2*ow, ow) banded matrix.

    Row block i of the result holds [max-channel band ; sum-channel band] for conv tap-row i,
    matching the kernel-side LHS layout concat_i([maxpool[r+i,:] | sumpool[r+i,:]]).  The BN
    scale and the 1/n_pool of the mean pooling are folded into the taps; bands are clipped at
    the edges so the lane-direction zero padding is implicit.  Returns (banded, const) with
    const = scale*(bias - running_mean) + beta.
    """
    scale = p["gamma"][0] / jnp.sqrt(p["rvar"][0] + p["eps"])
    w_eff = p["w"][0] * scale                      # (2, 7, 7): [0]=max taps, [1]=mean taps
    if transpose_hw:                               # width_gate is computed on the (C, H) plane
        w_eff = jnp.transpose(w_eff, (0, 2, 1))
    w_max = w_eff[0]
    w_sum = w_eff[1] / float(n_pool)               # mean pooling folded as sum * (tap / N)
    blocks = []
    for i in range(KSIZE):
        bm = jnp.zeros((ow, ow), jnp.float32)
        bs = jnp.zeros((ow, ow), jnp.float32)
        for j in range(KSIZE):
            d = jnp.eye(ow, k=PAD - j, dtype=jnp.float32)
            bm = bm + w_max[i, j] * d
            bs = bs + w_sum[i, j] * d
        blocks.append(jnp.concatenate([bm, bs], axis=0))        # (2*ow, ow)
    banded = jnp.concatenate(blocks, axis=0)                    # (KSIZE*2*ow, ow)
    const = scale * (p["b"][0] - p["rmean"][0]) + p["beta"][0]
    return banded, const


# ----------------------------- pure-JAX reference ------------------------------

def spatial_gate_ref(y, p):
    pooled = jnp.stack([jnp.max(y, axis=1), jnp.mean(y, axis=1)], axis=1)   # (B, 2, H, W)
    conv = lax.conv_general_dilated(pooled, p["w"], (1, 1), [(PAD, PAD), (PAD, PAD)],
                                    dimension_numbers=("NCHW", "OIHW", "NCHW"))
    conv = conv + p["b"].reshape(1, -1, 1, 1)
    out = (conv - p["rmean"].reshape(1, -1, 1, 1)) / jnp.sqrt(
        p["rvar"].reshape(1, -1, 1, 1) + p["eps"]) * p["gamma"].reshape(1, -1, 1, 1) \
        + p["beta"].reshape(1, -1, 1, 1)
    return out * jax.nn.sigmoid(out)


def triplet_ref(x, p1, p2, p3):
    o1 = jnp.transpose(spatial_gate_ref(jnp.transpose(x, (0, 2, 1, 3)), p1), (0, 2, 1, 3))
    o2 = jnp.transpose(spatial_gate_ref(jnp.transpose(x, (0, 3, 2, 1)), p2), (0, 3, 2, 1))
    o3 = spatial_gate_ref(x, p3)
    return (1.0 / 3.0) * (o1 + o2 + o3)


if __name__ == "__main__":
    key = jax.random.PRNGKey(0)
    kx, k1, k2, k3 = jax.random.split(key, 4)
    B, C, H, W = 2, 4, 16, 16
    x = jax.random.normal(kx, (B, C, H, W), jnp.float32)

    p1, p2, p3 = init_gate(k1), init_gate(k2), init_gate(k3)
    b1, c1 = fold_gate_banded(p1, n_pool=H, ow=W)                      # height_gate  -> (C, W)
    b2, c2 = fold_gate_banded(p2, n_pool=W, ow=H, transpose_hw=True)   # width_gate   -> (C, H)
    b3, c3 = fold_gate_banded(p3, n_pool=C, ow=W)                      # spatial_gate -> (H, W)
    consts = jnp.stack([c1, c2, c3]).astype(jnp.float32)               # (3,) SMEM constants

    # Combine constants (exact 0/1 values -> lossless in bf16).
    t1 = jnp.tile(jnp.eye(W, dtype=jnp.float32), (1, H))               # (W, H*W) tiled identity
    t2 = jnp.repeat(jnp.eye(H, dtype=jnp.float32), W, axis=1)          # (H, H*W) block ones
    t2b = jnp.tile(t2, (TB, 1))                                        # (TB*H, H*W)
    s_mat = jnp.kron(jnp.eye(TB, dtype=jnp.float32), jnp.ones((C, H), jnp.float32))

    # bf16 MXU operands (f32 accumulation stays in the kernel via preferred_element_type).
    b1, b2, b3 = (b.astype(jnp.bfloat16) for b in (b1, b2, b3))
    t1, t2b, s_mat = (m.astype(jnp.bfloat16) for m in (t1, t2b, s_mat))

    out = jax.block_until_ready(triplet_attention(x, b1, b2, b3, t1, t2b, s_mat, consts))

    ref = triplet_ref(x, p1, p2, p3)
    # Tolerance loosened from 1e-4 (f32) to 2e-2 because pooled planes / conv taps / combine
    # matrices are bf16 MXU operands (per the perf review); accumulation remains f32.
    np.testing.assert_allclose(np.asarray(out), np.asarray(ref), rtol=2e-2, atol=2e-2)
    print("KERNEL_OK")
</pallas_src>

<mosaic_0001>
module attributes {stable_mosaic.version = 11 : i64} {
  func.func @triplet_kernel(%arg0: i32, %arg1: memref<2x4x16x16xf32, #tpu.memory_space<vmem>>, %arg2: memref<224x16xbf16, #tpu.memory_space<vmem>>, %arg3: memref<224x16xbf16, #tpu.memory_space<vmem>>, %arg4: memref<224x16xbf16, #tpu.memory_space<vmem>>, %arg5: memref<16x256xbf16, #tpu.memory_space<vmem>>, %arg6: memref<32x256xbf16, #tpu.memory_space<vmem>>, %arg7: memref<8x32xbf16, #tpu.memory_space<vmem>>, %arg8: memref<3xf32, #tpu.memory_space<smem>>, %arg9: memref<8x256xf32, #tpu.memory_space<vmem>>, %arg10: memref<2x10x32xbf16, #tpu.memory_space<vmem>>, %arg11: memref<2x10x32xbf16, #tpu.memory_space<vmem>>, %arg12: memref<2x22x32xbf16, #tpu.memory_space<vmem>>) attributes {dimension_semantics = [#tpu.dimension_semantics<arbitrary>], iteration_bounds = array<i64: 1>, scalar_prefetch = 0 : i64, scratch_operands = 3 : i64, tpu.core_type = #tpu.core_type<tc>, window_params = [{transform_indices = @transform_0, window_bounds = array<i64: 2, 4, 16, 16>}, {pipeline_mode = #tpu.pipeline_mode<synchronous>, transform_indices = @transform_1, window_bounds = array<i64: 224, 16>}, {pipeline_mode = #tpu.pipeline_mode<synchronous>, transform_indices = @transform_2, window_bounds = array<i64: 224, 16>}, {pipeline_mode = #tpu.pipeline_mode<synchronous>, transform_indices = @transform_3, window_bounds = array<i64: 224, 16>}, {pipeline_mode = #tpu.pipeline_mode<synchronous>, transform_indices = @transform_4, window_bounds = array<i64: 16, 256>}, {pipeline_mode = #tpu.pipeline_mode<synchronous>, transform_indices = @transform_5, window_bounds = array<i64: 32, 256>}, {pipeline_mode = #tpu.pipeline_mode<synchronous>, transform_indices = @transform_6, window_bounds = array<i64: 8, 32>}, {transform_indices = @transform_7, window_bounds = array<i64: 3>}, {transform_indices = @transform_8, window_bounds = array<i64: 8, 256>}]} {
    %c0_i32 = arith.constant 0 : i32
    %0 = arith.cmpi eq, %arg0, %c0_i32 : i32
    %1 = arith.extui %0 : i1 to i32
    %c0_i32_0 = arith.constant 0 : i32
    %2 = arith.cmpi ne, %1, %c0_i32_0 : i32
    scf.if %2 {
      %cst_178 = arith.constant 0.000000e+00 : bf16
      %170 = vector.broadcast %cst_178 : bf16 to vector<2x3x32xbf16>
      %c0_179 = arith.constant 0 : index
      %c0_180 = arith.constant 0 : index
      %c0_181 = arith.constant 0 : index
      %171 = vector.load %arg10[%c0_179, %c0_180, %c0_181] : memref<2x10x32xbf16, #tpu.memory_space<vmem>>, vector<2x3x32xbf16>
      tpu.vector_store %arg10[%c0_179, %c0_180, %c0_181], %170 {strides = array<i32>} : memref<2x10x32xbf16, #tpu.memory_space<vmem>>, vector<2x3x32xbf16>,
      %cst_182 = arith.constant 0.000000e+00 : bf16
      %172 = vector.broadcast %cst_182 : bf16 to vector<2x3x32xbf16>
      %c0_183 = arith.constant 0 : index
      %c7 = arith.constant 7 : index
      %c0_184 = arith.constant 0 : index
      %173 = vector.load %arg10[%c0_183, %c7, %c0_184] : memref<2x10x32xbf16, #tpu.memory_space<vmem>>, vector<2x3x32xbf16>
      tpu.vector_store %arg10[%c0_183, %c7, %c0_184], %172 {strides = array<i32>} : memref<2x10x32xbf16, #tpu.memory_space<vmem>>, vector<2x3x32xbf16>,
      %cst_185 = arith.constant 0.000000e+00 : bf16
      %174 = vector.broadcast %cst_185 : bf16 to vector<2x3x32xbf16>
      %c0_186 = arith.constant 0 : index
      %c0_187 = arith.constant 0 : index
      %c0_188 = arith.constant 0 : index
      %175 = vector.load %arg11[%c0_186, %c0_187, %c0_188] : memref<2x10x32xbf16, #tpu.memory_space<vmem>>, vector<2x3x32xbf16>
      tpu.vector_store %arg11[%c0_186, %c0_187, %c0_188], %174 {strides = array<i32>} : memref<2x10x32xbf16, #tpu.memory_space<vmem>>, vector<2x3x32xbf16>,
      %cst_189 = arith.constant 0.000000e+00 : bf16
      %176 = vector.broadcast %cst_189 : bf16 to vector<2x3x32xbf16>
      %c0_190 = arith.constant 0 : index
      %c7_191 = arith.constant 7 : index
      %c0_192 = arith.constant 0 : index
      %177 = vector.load %arg11[%c0_190, %c7_191, %c0_192] : memref<2x10x32xbf16, #tpu.memory_space<vmem>>, vector<2x3x32xbf16>
      tpu.vector_store %arg11[%c0_190, %c7_191, %c0_192], %176 {strides = array<i32>} : memref<2x10x32xbf16, #tpu.memory_space<vmem>>, vector<2x3x32xbf16>,
      %cst_193 = arith.constant 0.000000e+00 : bf16
      %178 = vector.broadcast %cst_193 : bf16 to vector<2x3x32xbf16>
      %c0_194 = arith.constant 0 : index
      %c0_195 = arith.constant 0 : index
      %c0_196 = arith.constant 0 : index
      %179 = vector.load %arg12[%c0_194, %c0_195, %c0_196] : memref<2x22x32xbf16, #tpu.memory_space<vmem>>, vector<2x3x32xbf16>
      tpu.vector_store %arg12[%c0_194, %c0_195, %c0_196], %178 {strides = array<i32>} : memref<2x22x32xbf16, #tpu.memory_space<vmem>>, vector<2x3x32xbf16>,
      %cst_197 = arith.constant 0.000000e+00 : bf16
      %180 = vector.broadcast %cst_197 : bf16 to vector<2x3x32xbf16>
      %c0_198 = arith.constant 0 : index
      %c19 = arith.constant 19 : index
      %c0_199 = arith.constant 0 : index
      %181 = vector.load %arg12[%c0_198, %c19, %c0_199] : memref<2x22x32xbf16, #tpu.memory_space<vmem>>, vector<2x3x32xbf16>
      tpu.vector_store %arg12[%c0_198, %c19, %c0_199], %180 {strides = array<i32>} : memref<2x22x32xbf16, #tpu.memory_space<vmem>>, vector<2x3x32xbf16>,
    } else {
    }
    %c0 = arith.constant 0 : index
    %c0_1 = arith.constant 0 : index
    %c0_2 = arith.constant 0 : index
    %c0_3 = arith.constant 0 : index
    %3 = vector.load %arg1[%c0, %c0_1, %c0_2, %c0_3] : memref<2x4x16x16xf32, #tpu.memory_space<vmem>>, vector<2x4x16x16xf32>
    %cst = arith.constant dense<0xFF800000> : vector<2x4x16xf32>
    %4 = vector.multi_reduction <maximumf>, %3, %cst [2] : vector<2x4x16x16xf32> to vector<2x4x16xf32>
    %5 = arith.truncf %4 : vector<2x4x16xf32> to vector<2x4x16xbf16>
    %c0_4 = arith.constant 0 : index
    %c3 = arith.constant 3 : index
    %c0_5 = arith.constant 0 : index
    %6 = vector.load %arg10[%c0_4, %c3, %c0_5] : memref<2x10x32xbf16, #tpu.memory_space<vmem>>, vector<2x4x16xbf16>
    tpu.vector_store %arg10[%c0_4, %c3, %c0_5], %5 {strides = array<i32>} : memref<2x10x32xbf16, #tpu.memory_space<vmem>>, vector<2x4x16xbf16>,
    %cst_6 = arith.constant dense<0.000000e+00> : vector<2x4x16xf32>
    %7 = vector.multi_reduction <add>, %3, %cst_6 [2] : vector<2x4x16x16xf32> to vector<2x4x16xf32>
    %8 = arith.truncf %7 : vector<2x4x16xf32> to vector<2x4x16xbf16>
    %c0_7 = arith.constant 0 : index
    %c3_8 = arith.constant 3 : index
    %c16 = arith.constant 16 : index
    %9 = vector.load %arg10[%c0_7, %c3_8, %c16] : memref<2x10x32xbf16, #tpu.memory_space<vmem>>, vector<2x4x16xbf16>
    tpu.vector_store %arg10[%c0_7, %c3_8, %c16], %8 {strides = array<i32>} : memref<2x10x32xbf16, #tpu.memory_space<vmem>>, vector<2x4x16xbf16>,
    %cst_9 = arith.constant dense<0xFF800000> : vector<2x4x16xf32>
    %10 = vector.multi_reduction <maximumf>, %3, %cst_9 [3] : vector<2x4x16x16xf32> to vector<2x4x16xf32>
    %11 = arith.truncf %10 : vector<2x4x16xf32> to vector<2x4x16xbf16>
    %c0_10 = arith.constant 0 : index
    %c3_11 = arith.constant 3 : index
    %c0_12 = arith.constant 0 : index
    %12 = vector.load %arg11[%c0_10, %c3_11, %c0_12] : memref<2x10x32xbf16, #tpu.memory_space<vmem>>, vector<2x4x16xbf16>
    tpu.vector_store %arg11[%c0_10, %c3_11, %c0_12], %11 {strides = array<i32>} : memref<2x10x32xbf16, #tpu.memory_space<vmem>>, vector<2x4x16xbf16>,
    %cst_13 = arith.constant dense<0.000000e+00> : vector<2x4x16xf32>
    %13 = vector.multi_reduction <add>, %3, %cst_13 [3] : vector<2x4x16x16xf32> to vector<2x4x16xf32>
    %14 = arith.truncf %13 : vector<2x4x16xf32> to vector<2x4x16xbf16>
    %c0_14 = arith.constant 0 : index
    %c3_15 = arith.constant 3 : index
    %c16_16 = arith.constant 16 : index
    %15 = vector.load %arg11[%c0_14, %c3_15, %c16_16] : memref<2x10x32xbf16, #tpu.memory_space<vmem>>, vector<2x4x16xbf16>
    tpu.vector_store %arg11[%c0_14, %c3_15, %c16_16], %14 {strides = array<i32>} : memref<2x10x32xbf16, #tpu.memory_space<vmem>>, vector<2x4x16xbf16>,
    %cst_17 = arith.constant dense<0xFF800000> : vector<2x16x16xf32>
    %16 = vector.multi_reduction <maximumf>, %3, %cst_17 [1] : vector<2x4x16x16xf32> to vector<2x16x16xf32>
    %17 = arith.truncf %16 : vector<2x16x16xf32> to vector<2x16x16xbf16>
    %c0_18 = arith.constant 0 : index
    %c3_19 = arith.constant 3 : index
    %c0_20 = arith.constant 0 : index
    %18 = vector.load %arg12[%c0_18, %c3_19, %c0_20] : memref<2x22x32xbf16, #tpu.memory_space<vmem>>, vector<2x16x16xbf16>
    tpu.vector_store %arg12[%c0_18, %c3_19, %c0_20], %17 {strides = array<i32>} : memref<2x22x32xbf16, #tpu.memory_space<vmem>>, vector<2x16x16xbf16>,
    %cst_21 = arith.constant dense<0.000000e+00> : vector<2x16x16xf32>
    %19 = vector.multi_reduction <add>, %3, %cst_21 [1] : vector<2x4x16x16xf32> to vector<2x16x16xf32>
    %20 = arith.truncf %19 : vector<2x16x16xf32> to vector<2x16x16xbf16>
    %c0_22 = arith.constant 0 : index
    %c3_23 = arith.constant 3 : index
    %c16_24 = arith.constant 16 : index
    %21 = vector.load %arg12[%c0_22, %c3_23, %c16_24] : memref<2x22x32xbf16, #tpu.memory_space<vmem>>, vector<2x16x16xbf16>
    tpu.vector_store %arg12[%c0_22, %c3_23, %c16_24], %20 {strides = array<i32>} : memref<2x22x32xbf16, #tpu.memory_space<vmem>>, vector<2x16x16xbf16>,
    %c0_25 = arith.constant 0 : index
    %22 = memref.load %arg8[%c0_25] : memref<3xf32, #tpu.memory_space<smem>>
    %c0_26 = arith.constant 0 : index
    %c0_27 = arith.constant 0 : index
    %c0_28 = arith.constant 0 : index
    %23 = vector.load %arg10[%c0_26, %c0_27, %c0_28] : memref<2x10x32xbf16, #tpu.memory_space<vmem>>, vector<1x4x32xbf16>
    %24 = vector.shape_cast %23 : vector<1x4x32xbf16> to vector<4x32xbf16>
    %c0_29 = arith.constant 0 : index
    %c1 = arith.constant 1 : index
    %c0_30 = arith.constant 0 : index
    %25 = vector.load %arg10[%c0_29, %c1, %c0_30] : memref<2x10x32xbf16, #tpu.memory_space<vmem>>, vector<1x4x32xbf16>
    %26 = vector.shape_cast %25 : vector<1x4x32xbf16> to vector<4x32xbf16>
    %c0_31 = arith.constant 0 : index
    %c2 = arith.constant 2 : index
    %c0_32 = arith.constant 0 : index
    %27 = vector.load %arg10[%c0_31, %c2, %c0_32] : memref<2x10x32xbf16, #tpu.memory_space<vmem>>, vector<1x4x32xbf16>
    %28 = vector.shape_cast %27 : vector<1x4x32xbf16> to vector<4x32xbf16>
    %c0_33 = arith.constant 0 : index
    %c3_34 = arith.constant 3 : index
    %c0_35 = arith.constant 0 : index
    %29 = vector.load %arg10[%c0_33, %c3_34, %c0_35] : memref<2x10x32xbf16, #tpu.memory_space<vmem>>, vector<1x4x32xbf16>
    %30 = vector.shape_cast %29 : vector<1x4x32xbf16> to vector<4x32xbf16>
    %c0_36 = arith.constant 0 : index
    %c4 = arith.constant 4 : index
    %c0_37 = arith.constant 0 : index
    %31 = vector.load %arg10[%c0_36, %c4, %c0_37] : memref<2x10x32xbf16, #tpu.memory_space<vmem>>, vector<1x4x32xbf16>
    %32 = vector.shape_cast %31 : vector<1x4x32xbf16> to vector<4x32xbf16>
    %c0_38 = arith.constant 0 : index
    %c5 = arith.constant 5 : index
    %c0_39 = arith.constant 0 : index
    %33 = vector.load %arg10[%c0_38, %c5, %c0_39] : memref<2x10x32xbf16, #tpu.memory_space<vmem>>, vector<1x4x32xbf16>
    %34 = vector.shape_cast %33 : vector<1x4x32xbf16> to vector<4x32xbf16>
    %c0_40 = arith.constant 0 : index
    %c6 = arith.constant 6 : index
    %c0_41 = arith.constant 0 : index
    %35 = vector.load %arg10[%c0_40, %c6, %c0_41] : memref<2x10x32xbf16, #tpu.memory_space<vmem>>, vector<1x4x32xbf16>
    %36 = vector.shape_cast %35 : vector<1x4x32xbf16> to vector<4x32xbf16>
    %37 = tpu.concatenate %24, %26, %28, %30, %32, %34, %36 in 1 : vector<4x32xbf16>, vector<4x32xbf16>, vector<4x32xbf16>, vector<4x32xbf16>, vector<4x32xbf16>, vector<4x32xbf16>, vector<4x32xbf16> -> vector<4x224xbf16>
    %c1_42 = arith.constant 1 : index
    %c0_43 = arith.constant 0 : index
    %c0_44 = arith.constant 0 : index
    %38 = vector.load %arg10[%c1_42, %c0_43, %c0_44] : memref<2x10x32xbf16, #tpu.memory_space<vmem>>, vector<1x4x32xbf16>
    %39 = vector.shape_cast %38 : vector<1x4x32xbf16> to vector<4x32xbf16>
    %c1_45 = arith.constant 1 : index
    %c1_46 = arith.constant 1 : index
    %c0_47 = arith.constant 0 : index
    %40 = vector.load %arg10[%c1_45, %c1_46, %c0_47] : memref<2x10x32xbf16, #tpu.memory_space<vmem>>, vector<1x4x32xbf16>
    %41 = vector.shape_cast %40 : vector<1x4x32xbf16> to vector<4x32xbf16>
    %c1_48 = arith.constant 1 : index
    %c2_49 = arith.constant 2 : index
    %c0_50 = arith.constant 0 : index
    %42 = vector.load %arg10[%c1_48, %c2_49, %c0_50] : memref<2x10x32xbf16, #tpu.memory_space<vmem>>, vector<1x4x32xbf16>
    %43 = vector.shape_cast %42 : vector<1x4x32xbf16> to vector<4x32xbf16>
    %c1_51 = arith.constant 1 : index
    %c3_52 = arith.constant 3 : index
    %c0_53 = arith.constant 0 : index
    %44 = vector.load %arg10[%c1_51, %c3_52, %c0_53] : memref<2x10x32xbf16, #tpu.memory_space<vmem>>, vector<1x4x32xbf16>
    %45 = vector.shape_cast %44 : vector<1x4x32xbf16> to vector<4x32xbf16>
    %c1_54 = arith.constant 1 : index
    %c4_55 = arith.constant 4 : index
    %c0_56 = arith.constant 0 : index
    %46 = vector.load %arg10[%c1_54, %c4_55, %c0_56] : memref<2x10x32xbf16, #tpu.memory_space<vmem>>, vector<1x4x32xbf16>
    %47 = vector.shape_cast %46 : vector<1x4x32xbf16> to vector<4x32xbf16>
    %c1_57 = arith.constant 1 : index
    %c5_58 = arith.constant 5 : index
    %c0_59 = arith.constant 0 : index
    %48 = vector.load %arg10[%c1_57, %c5_58, %c0_59] : memref<2x10x32xbf16, #tpu.memory_space<vmem>>, vector<1x4x32xbf16>
    %49 = vector.shape_cast %48 : vector<1x4x32xbf16> to vector<4x32xbf16>
    %c1_60 = arith.constant 1 : index
    %c6_61 = arith.constant 6 : index
    %c0_62 = arith.constant 0 : index
    %50 = vector.load %arg10[%c1_60, %c6_61, %c0_62] : memref<2x10x32xbf16, #tpu.memory_space<vmem>>, vector<1x4x32xbf16>
    %51 = vector.shape_cast %50 : vector<1x4x32xbf16> to vector<4x32xbf16>
    %52 = tpu.concatenate %39, %41, %43, %45, %47, %49, %51 in 1 : vector<4x32xbf16>, vector<4x32xbf16>, vector<4x32xbf16>, vector<4x32xbf16>, vector<4x32xbf16>, vector<4x32xbf16>, vector<4x32xbf16> -> vector<4x224xbf16>
    %53 = tpu.concatenate %37, %52 in 0 : vector<4x224xbf16>, vector<4x224xbf16> -> vector<8x224xbf16>
    %c0_63 = arith.constant 0 : index
    %c0_64 = arith.constant 0 : index
    %54 = vector.load %arg2[%c0_63, %c0_64] : memref<224x16xbf16, #tpu.memory_space<vmem>>, vector<224x16xbf16>
    %cst_65 = arith.constant dense<0.000000e+00> : vector<8x16xf32>
    %55 = tpu.matmul %53, %54, %cst_65 {dimension_numbers = #tpu.dot_dimension_numbers<[1], [0], [0], [1], [0, 0, 1, 1], [], []>} : vector<8x224xbf16>, vector<224x16xbf16>, vector<8x16xf32> -> vector<8x16xf32>
    %56 = vector.broadcast %22 : f32 to vector<8x16xf32>
    %57 = arith.addf %55, %56 : vector<8x16xf32>
    %58 = arith.negf %57 : vector<8x16xf32>
    %59 = math.exp %58 : vector<8x16xf32>
    %cst_66 = arith.constant 1.000000e+00 : f32
    %60 = vector.broadcast %cst_66 : f32 to vector<8x16xf32>
    %61 = arith.addf %60, %59 : vector<8x16xf32>
    %62 = arith.divf %60, %61 : vector<8x16xf32>
    %63 = arith.mulf %57, %62 : vector<8x16xf32>
    %cst_67 = arith.constant 0.333333343 : f32
    %64 = vector.broadcast %cst_67 : f32 to vector<8x16xf32>
    %65 = arith.mulf %63, %64 : vector<8x16xf32>
    %c1_68 = arith.constant 1 : index
    %66 = memref.load %arg8[%c1_68] : memref<3xf32, #tpu.memory_space<smem>>
    %c0_69 = arith.constant 0 : index
    %c0_70 = arith.constant 0 : index
    %c0_71 = arith.constant 0 : index
    %67 = vector.load %arg11[%c0_69, %c0_70, %c0_71] : memref<2x10x32xbf16, #tpu.memory_space<vmem>>, vector<1x4x32xbf16>
    %68 = vector.shape_cast %67 : vector<1x4x32xbf16> to vector<4x32xbf16>
    %c0_72 = arith.constant 0 : index
    %c1_73 = arith.constant 1 : index
    %c0_74 = arith.constant 0 : index
    %69 = vector.load %arg11[%c0_72, %c1_73, %c0_74] : memref<2x10x32xbf16, #tpu.memory_space<vmem>>, vector<1x4x32xbf16>
    %70 = vector.shape_cast %69 : vector<1x4x32xbf16> to vector<4x32xbf16>
    %c0_75 = arith.constant 0 : index
    %c2_76 = arith.constant 2 : index
    %c0_77 = arith.constant 0 : index
    %71 = vector.load %arg11[%c0_75, %c2_76, %c0_77] : memref<2x10x32xbf16, #tpu.memory_space<vmem>>, vector<1x4x32xbf16>
    %72 = vector.shape_cast %71 : vector<1x4x32xbf16> to vector<4x32xbf16>
    %c0_78 = arith.constant 0 : index
    %c3_79 = arith.constant 3 : index
    %c0_80 = arith.constant 0 : index
    %73 = vector.load %arg11[%c0_78, %c3_79, %c0_80] : memref<2x10x32xbf16, #tpu.memory_space<vmem>>, vector<1x4x32xbf16>
    %74 = vector.shape_cast %73 : vector<1x4x32xbf16> to vector<4x32xbf16>
    %c0_81 = arith.constant 0 : index
    %c4_82 = arith.constant 4 : index
    %c0_83 = arith.constant 0 : index
    %75 = vector.load %arg11[%c0_81, %c4_82, %c0_83] : memref<2x10x32xbf16, #tpu.memory_space<vmem>>, vector<1x4x32xbf16>
    %76 = vector.shape_cast %75 : vector<1x4x32xbf16> to vector<4x32xbf16>
    %c0_84 = arith.constant 0 : index
    %c5_85 = arith.constant 5 : index
    %c0_86 = arith.constant 0 : index
    %77 = vector.load %arg11[%c0_84, %c5_85, %c0_86] : memref<2x10x32xbf16, #tpu.memory_space<vmem>>, vector<1x4x32xbf16>
    %78 = vector.shape_cast %77 : vector<1x4x32xbf16> to vector<4x32xbf16>
    %c0_87 = arith.constant 0 : index
    %c6_88 = arith.constant 6 : index
    %c0_89 = arith.constant 0 : index
    %79 = vector.load %arg11[%c0_87, %c6_88, %c0_89] : memref<2x10x32xbf16, #tpu.memory_space<vmem>>, vector<1x4x32xbf16>
    %80 = vector.shape_cast %79 : vector<1x4x32xbf16> to vector<4x32xbf16>
    %81 = tpu.concatenate %68, %70, %72, %74, %76, %78, %80 in 1 : vector<4x32xbf16>, vector<4x32xbf16>, vector<4x32xbf16>, vector<4x32xbf16>, vector<4x32xbf16>, vector<4x32xbf16>, vector<4x32xbf16> -> vector<4x224xbf16>
    %c1_90 = arith.constant 1 : index
    %c0_91 = arith.constant 0 : index
    %c0_92 = arith.constant 0 : index
    %82 = vector.load %arg11[%c1_90, %c0_91, %c0_92] : memref<2x10x32xbf16, #tpu.memory_space<vmem>>, vector<1x4x32xbf16>
    %83 = vector.shape_cast %82 : vector<1x4x32xbf16> to vector<4x32xbf16>
    %c1_93 = arith.constant 1 : index
    %c1_94 = arith.constant 1 : index
    %c0_95 = arith.constant 0 : index
    %84 = vector.load %arg11[%c1_93, %c1_94, %c0_95] : memref<2x10x32xbf16, #tpu.memory_space<vmem>>, vector<1x4x32xbf16>
    %85 = vector.shape_cast %84 : vector<1x4x32xbf16> to vector<4x32xbf16>
    %c1_96 = arith.constant 1 : index
    %c2_97 = arith.constant 2 : index
    %c0_98 = arith.constant 0 : index
    %86 = vector.load %arg11[%c1_96, %c2_97, %c0_98] : memref<2x10x32xbf16, #tpu.memory_space<vmem>>, vector<1x4x32xbf16>
    %87 = vector.shape_cast %86 : vector<1x4x32xbf16> to vector<4x32xbf16>
    %c1_99 = arith.constant 1 : index
    %c3_100 = arith.constant 3 : index
    %c0_101 = arith.constant 0 : index
    %88 = vector.load %arg11[%c1_99, %c3_100, %c0_101] : memref<2x10x32xbf16, #tpu.memory_space<vmem>>, vector<1x4x32xbf16>
    %89 = vector.shape_cast %88 : vector<1x4x32xbf16> to vector<4x32xbf16>
    %c1_102 = arith.constant 1 : index
    %c4_103 = arith.constant 4 : index
    %c0_104 = arith.constant 0 : index
    %90 = vector.load %arg11[%c1_102, %c4_103, %c0_104] : memref<2x10x32xbf16, #tpu.memory_space<vmem>>, vector<1x4x32xbf16>
    %91 = vector.shape_cast %90 : vector<1x4x32xbf16> to vector<4x32xbf16>
    %c1_105 = arith.constant 1 : index
    %c5_106 = arith.constant 5 : index
    %c0_107 = arith.constant 0 : index
    %92 = vector.load %arg11[%c1_105, %c5_106, %c0_107] : memref<2x10x32xbf16, #tpu.memory_space<vmem>>, vector<1x4x32xbf16>
    %93 = vector.shape_cast %92 : vector<1x4x32xbf16> to vector<4x32xbf16>
    %c1_108 = arith.constant 1 : index
    %c6_109 = arith.constant 6 : index
    %c0_110 = arith.constant 0 : index
    %94 = vector.load %arg11[%c1_108, %c6_109, %c0_110] : memref<2x10x32xbf16, #tpu.memory_space<vmem>>, vector<1x4x32xbf16>
    %95 = vector.shape_cast %94 : vector<1x4x32xbf16> to vector<4x32xbf16>
    %96 = tpu.concatenate %83, %85, %87, %89, %91, %93, %95 in 1 : vector<4x32xbf16>, vector<4x32xbf16>, vector<4x32xbf16>, vector<4x32xbf16>, vector<4x32xbf16>, vector<4x32xbf16>, vector<4x32xbf16> -> vector<4x224xbf16>
    %97 = tpu.concatenate %81, %96 in 0 : vector<4x224xbf16>, vector<4x224xbf16> -> vector<8x224xbf16>
    %c0_111 = arith.constant 0 : index
    %c0_112 = arith.constant 0 : index
    %98 = vector.load %arg3[%c0_111, %c0_112] : memref<224x16xbf16, #tpu.memory_space<vmem>>, vector<224x16xbf16>
    %cst_113 = arith.constant dense<0.000000e+00> : vector<8x16xf32>
    %99 = tpu.matmul %97, %98, %cst_113 {dimension_numbers = #tpu.dot_dimension_numbers<[1], [0], [0], [1], [0, 0, 1, 1], [], []>} : vector<8x224xbf16>, vector<224x16xbf16>, vector<8x16xf32> -> vector<8x16xf32>
    %100 = vector.broadcast %66 : f32 to vector<8x16xf32>
    %101 = arith.addf %99, %100 : vector<8x16xf32>
    %102 = arith.negf %101 : vector<8x16xf32>
    %103 = math.exp %102 : vector<8x16xf32>
    %cst_114 = arith.constant 1.000000e+00 : f32
    %104 = vector.broadcast %cst_114 : f32 to vector<8x16xf32>
    %105 = arith.addf %104, %103 : vector<8x16xf32>
    %106 = arith.divf %104, %105 : vector<8x16xf32>
    %107 = arith.mulf %101, %106 : vector<8x16xf32>
    %cst_115 = arith.constant 0.333333343 : f32
    %108 = vector.broadcast %cst_115 : f32 to vector<8x16xf32>
    %109 = arith.mulf %107, %108 : vector<8x16xf32>
    %c2_116 = arith.constant 2 : index
    %110 = memref.load %arg8[%c2_116] : memref<3xf32, #tpu.memory_space<smem>>
    %c0_117 = arith.constant 0 : index
    %c0_118 = arith.constant 0 : index
    %c0_119 = arith.constant 0 : index
    %111 = vector.load %arg12[%c0_117, %c0_118, %c0_119] : memref<2x22x32xbf16, #tpu.memory_space<vmem>>, vector<1x16x32xbf16>
    %112 = vector.shape_cast %111 : vector<1x16x32xbf16> to vector<16x32xbf16>
    %c0_120 = arith.constant 0 : index
    %c1_121 = arith.constant 1 : index
    %c0_122 = arith.constant 0 : index
    %113 = vector.load %arg12[%c0_120, %c1_121, %c0_122] : memref<2x22x32xbf16, #tpu.memory_space<vmem>>, vector<1x16x32xbf16>
    %114 = vector.shape_cast %113 : vector<1x16x32xbf16> to vector<16x32xbf16>
    %c0_123 = arith.constant 0 : index
    %c2_124 = arith.constant 2 : index
    %c0_125 = arith.constant 0 : index
    %115 = vector.load %arg12[%c0_123, %c2_124, %c0_125] : memref<2x22x32xbf16, #tpu.memory_space<vmem>>, vector<1x16x32xbf16>
    %116 = vector.shape_cast %115 : vector<1x16x32xbf16> to vector<16x32xbf16>
    %c0_126 = arith.constant 0 : index
    %c3_127 = arith.constant 3 : index
    %c0_128 = arith.constant 0 : index
    %117 = vector.load %arg12[%c0_126, %c3_127, %c0_128] : memref<2x22x32xbf16, #tpu.memory_space<vmem>>, vector<1x16x32xbf16>
    %118 = vector.shape_cast %117 : vector<1x16x32xbf16> to vector<16x32xbf16>
    %c0_129 = arith.constant 0 : index
    %c4_130 = arith.constant 4 : index
    %c0_131 = arith.constant 0 : index
    %119 = vector.load %arg12[%c0_129, %c4_130, %c0_131] : memref<2x22x32xbf16, #tpu.memory_space<vmem>>, vector<1x16x32xbf16>
    %120 = vector.shape_cast %119 : vector<1x16x32xbf16> to vector<16x32xbf16>
    %c0_132 = arith.constant 0 : index
    %c5_133 = arith.constant 5 : index
    %c0_134 = arith.constant 0 : index
    %121 = vector.load %arg12[%c0_132, %c5_133, %c0_134] : memref<2x22x32xbf16, #tpu.memory_space<vmem>>, vector<1x16x32xbf16>
    %122 = vector.shape_cast %121 : vector<1x16x32xbf16> to vector<16x32xbf16>
    %c0_135 = arith.constant 0 : index
    %c6_136 = arith.constant 6 : index
    %c0_137 = arith.constant 0 : index
    %123 = vector.load %arg12[%c0_135, %c6_136, %c0_137] : memref<2x22x32xbf16, #tpu.memory_space<vmem>>, vector<1x16x32xbf16>
    %124 = vector.shape_cast %123 : vector<1x16x32xbf16> to vector<16x32xbf16>
    %125 = tpu.concatenate %112, %114, %116, %118, %120, %122, %124 in 1 : vector<16x32xbf16>, vector<16x32xbf16>, vector<16x32xbf16>, vector<16x32xbf16>, vector<16x32xbf16>, vector<16x32xbf16>, vector<16x32xbf16> -> vector<16x224xbf16>
    %c1_138 = arith.constant 1 : index
    %c0_139 = arith.constant 0 : index
    %c0_140 = arith.constant 0 : index
    %126 = vector.load %arg12[%c1_138, %c0_139, %c0_140] : memref<2x22x32xbf16, #tpu.memory_space<vmem>>, vector<1x16x32xbf16>
    %127 = vector.shape_cast %126 : vector<1x16x32xbf16> to vector<16x32xbf16>
    %c1_141 = arith.constant 1 : index
    %c1_142 = arith.constant 1 : index
    %c0_143 = arith.constant 0 : index
    %128 = vector.load %arg12[%c1_141, %c1_142, %c0_143] : memref<2x22x32xbf16, #tpu.memory_space<vmem>>, vector<1x16x32xbf16>
    %129 = vector.shape_cast %128 : vector<1x16x32xbf16> to vector<16x32xbf16>
    %c1_144 = arith.constant 1 : index
    %c2_145 = arith.constant 2 : index
    %c0_146 = arith.constant 0 : index
    %130 = vector.load %arg12[%c1_144, %c2_145, %c0_146] : memref<2x22x32xbf16, #tpu.memory_space<vmem>>, vector<1x16x32xbf16>
    %131 = vector.shape_cast %130 : vector<1x16x32xbf16> to vector<16x32xbf16>
    %c1_147 = arith.constant 1 : index
    %c3_148 = arith.constant 3 : index
    %c0_149 = arith.constant 0 : index
    %132 = vector.load %arg12[%c1_147, %c3_148, %c0_149] : memref<2x22x32xbf16, #tpu.memory_space<vmem>>, vector<1x16x32xbf16>
    %133 = vector.shape_cast %132 : vector<1x16x32xbf16> to vector<16x32xbf16>
    %c1_150 = arith.constant 1 : index
    %c4_151 = arith.constant 4 : index
    %c0_152 = arith.constant 0 : index
    %134 = vector.load %arg12[%c1_150, %c4_151, %c0_152] : memref<2x22x32xbf16, #tpu.memory_space<vmem>>, vector<1x16x32xbf16>
    %135 = vector.shape_cast %134 : vector<1x16x32xbf16> to vector<16x32xbf16>
    %c1_153 = arith.constant 1 : index
    %c5_154 = arith.constant 5 : index
    %c0_155 = arith.constant 0 : index
    %136 = vector.load %arg12[%c1_153, %c5_154, %c0_155] : memref<2x22x32xbf16, #tpu.memory_space<vmem>>, vector<1x16x32xbf16>
    %137 = vector.shape_cast %136 : vector<1x16x32xbf16> to vector<16x32xbf16>
    %c1_156 = arith.constant 1 : index
    %c6_157 = arith.constant 6 : index
    %c0_158 = arith.constant 0 : index
    %138 = vector.load %arg12[%c1_156, %c6_157, %c0_158] : memref<2x22x32xbf16, #tpu.memory_space<vmem>>, vector<1x16x32xbf16>
    %139 = vector.shape_cast %138 : vector<1x16x32xbf16> to vector<16x32xbf16>
    %140 = tpu.concatenate %127, %129, %131, %133, %135, %137, %139 in 1 : vector<16x32xbf16>, vector<16x32xbf16>, vector<16x32xbf16>, vector<16x32xbf16>, vector<16x32xbf16>, vector<16x32xbf16>, vector<16x32xbf16> -> vector<16x224xbf16>
    %141 = tpu.concatenate %125, %140 in 0 : vector<16x224xbf16>, vector<16x224xbf16> -> vector<32x224xbf16>
    %c0_159 = arith.constant 0 : index
    %c0_160 = arith.constant 0 : index
    %142 = vector.load %arg4[%c0_159, %c0_160] : memref<224x16xbf16, #tpu.memory_space<vmem>>, vector<224x16xbf16>
    %cst_161 = arith.constant dense<0.000000e+00> : vector<32x16xf32>
    %143 = tpu.matmul %141, %142, %cst_161 {dimension_numbers = #tpu.dot_dimension_numbers<[1], [0], [0], [1], [0, 0, 1, 1], [], []>} : vector<32x224xbf16>, vector<224x16xbf16>, vector<32x16xf32> -> vector<32x16xf32>
    %144 = vector.broadcast %110 : f32 to vector<32x16xf32>
    %145 = arith.addf %143, %144 : vector<32x16xf32>
    %146 = arith.negf %145 : vector<32x16xf32>
    %147 = math.exp %146 : vector<32x16xf32>
    %cst_162 = arith.constant 1.000000e+00 : f32
    %148 = vector.broadcast %cst_162 : f32 to vector<32x16xf32>
    %149 = arith.addf %148, %147 : vector<32x16xf32>
    %150 = arith.divf %148, %149 : vector<32x16xf32>
    %151 = arith.mulf %145, %150 : vector<32x16xf32>
    %cst_163 = arith.constant 0.333333343 : f32
    %152 = vector.broadcast %cst_163 : f32 to vector<32x16xf32>
    %153 = arith.mulf %151, %152 : vector<32x16xf32>
    %c0_164 = arith.constant 0 : index
    %c0_165 = arith.constant 0 : index
    %154 = vector.load %arg5[%c0_164, %c0_165] : memref<16x256xbf16, #tpu.memory_space<vmem>>, vector<16x256xbf16>
    %155 = arith.truncf %65 : vector<8x16xf32> to vector<8x16xbf16>
    %cst_166 = arith.constant dense<0.000000e+00> : vector<8x256xf32>
    %156 = tpu.matmul %155, %154, %cst_166 {dimension_numbers = #tpu.dot_dimension_numbers<[1], [0], [0], [1], [0, 0, 1, 1], [], []>} : vector<8x16xbf16>, vector<16x256xbf16>, vector<8x256xf32> -> vector<8x256xf32>
    %157 = arith.truncf %109 : vector<8x16xf32> to vector<8x16xbf16>
    %c0_167 = arith.constant 0 : index
    %c0_168 = arith.constant 0 : index
    %158 = vector.load %arg6[%c0_167, %c0_168] : memref<32x256xbf16, #tpu.memory_space<vmem>>, vector<16x256xbf16>
    %cst_169 = arith.constant dense<0.000000e+00> : vector<8x256xf32>
    %159 = tpu.matmul %157, %158, %cst_169 {dimension_numbers = #tpu.dot_dimension_numbers<[1], [0], [0], [1], [0, 0, 1, 1], [], []>} : vector<8x16xbf16>, vector<16x256xbf16>, vector<8x256xf32> -> vector<8x256xf32>
    %160 = arith.truncf %153 : vector<32x16xf32> to vector<32x16xbf16>
    %cst_170 = arith.constant dense<0.000000e+00> : vector<32x256xf32>
    %161 = tpu.matmul %160, %154, %cst_170 {dimension_numbers = #tpu.dot_dimension_numbers<[1], [0], [0], [1], [0, 0, 1, 1], [], []>} : vector<32x16xbf16>, vector<16x256xbf16>, vector<32x256xf32> -> vector<32x256xf32>
    %c0_171 = arith.constant 0 : index
    %c0_172 = arith.constant 0 : index
    %162 = vector.load %arg6[%c0_171, %c0_172] : memref<32x256xbf16, #tpu.memory_space<vmem>>, vector<32x256xbf16>
    %163 = arith.truncf %161 : vector<32x256xf32> to vector<32x256xbf16>
    %164 = arith.mulf %162, %163 : vector<32x256xbf16>
    %c0_173 = arith.constant 0 : index
    %c0_174 = arith.constant 0 : index
    %165 = vector.load %arg7[%c0_173, %c0_174] : memref<8x32xbf16, #tpu.memory_space<vmem>>, vector<8x32xbf16>
    %cst_175 = arith.constant dense<0.000000e+00> : vector<8x256xf32>
    %166 = tpu.matmul %165, %164, %cst_175 {dimension_numbers = #tpu.dot_dimension_numbers<[1], [0], [0], [1], [0, 0, 1, 1], [], []>} : vector<8x32xbf16>, vector<32x256xbf16>, vector<8x256xf32> -> vector<8x256xf32>
    %167 = arith.addf %156, %159 : vector<8x256xf32>
    %168 = arith.addf %167, %166 : vector<8x256xf32>
    %c0_176 = arith.constant 0 : index
    %c0_177 = arith.constant 0 : index
    %169 = vector.load %arg9[%c0_176, %c0_177] : memref<8x256xf32, #tpu.memory_space<vmem>>, vector<8x256xf32>
    tpu.vector_store %arg9[%c0_176, %c0_177], %168 {strides = array<i32>} : memref<8x256xf32, #tpu.memory_space<vmem>>, vector<8x256xf32>,
    return
  }
  func.func @transform_0(%arg0: i32) -> (i32, i32, i32, i32) {
    %c0_i32 = arith.constant 0 : i32
    %c0_i32_0 = arith.constant 0 : i32
    %c0_i32_1 = arith.constant 0 : i32
    %c0_i32_2 = arith.constant 0 : i32
    return %arg0, %c0_i32, %c0_i32_0, %c0_i32_1 : i32, i32, i32, i32
  }
  func.func @transform_1(%arg0: i32) -> (i32, i32) {
    %c0_i32 = arith.constant 0 : i32
    %c0_i32_0 = arith.constant 0 : i32
    %c0_i32_1 = arith.constant 0 : i32
    return %c0_i32, %c0_i32_0 : i32, i32
  }
  func.func @transform_2(%arg0: i32) -> (i32, i32) {
    %c0_i32 = arith.constant 0 : i32
    %c0_i32_0 = arith.constant 0 : i32
    %c0_i32_1 = arith.constant 0 : i32
    return %c0_i32, %c0_i32_0 : i32, i32
  }
  func.func @transform_3(%arg0: i32) -> (i32, i32) {
    %c0_i32 = arith.constant 0 : i32
    %c0_i32_0 = arith.constant 0 : i32
    %c0_i32_1 = arith.constant 0 : i32
    return %c0_i32, %c0_i32_0 : i32, i32
  }
  func.func @transform_4(%arg0: i32) -> (i32, i32) {
    %c0_i32 = arith.constant 0 : i32
    %c0_i32_0 = arith.constant 0 : i32
    %c0_i32_1 = arith.constant 0 : i32
    return %c0_i32, %c0_i32_0 : i32, i32
  }
  func.func @transform_5(%arg0: i32) -> (i32, i32) {
    %c0_i32 = arith.constant 0 : i32
    %c0_i32_0 = arith.constant 0 : i32
    %c0_i32_1 = arith.constant 0 : i32
    return %c0_i32, %c0_i32_0 : i32, i32
  }
  func.func @transform_6(%arg0: i32) -> (i32, i32) {
    %c0_i32 = arith.constant 0 : i32
    %c0_i32_0 = arith.constant 0 : i32
    %c0_i32_1 = arith.constant 0 : i32
    return %c0_i32, %c0_i32_0 : i32, i32
  }
  func.func @transform_7(%arg0: i32) -> i32 {
    %c0_i32 = arith.constant 0 : i32
    %c0_i32_0 = arith.constant 0 : i32
    return %c0_i32 : i32
  }
  func.func @transform_8(%arg0: i32) -> (i32, i32) {
    %c0_i32 = arith.constant 0 : i32
    %c0_i32_0 = arith.constant 0 : i32
    return %arg0, %c0_i32 : i32, i32
  }
}

</mosaic_0001>

<llo_original>
// kernel: tpu_custom_call.1
$region0: #{tpu_custom_call.1}
  #allocation0 [shape = 'u32[]', space=smem, size = 0x4, offset = 0x4, fixed_abs, tag = 'smem constant byte address 0x4 - core index']
  #allocation1 [shape = 'u32[144,128]{1,0:T(1,128)}', space=vmem, size = 0x12000, scoped, tag = 'internal scratch']
  #allocation2 [shape = 'bf16[2,10,32]{2,1,0:T(8,128)(2,1)}', space=vmem, size = 0x2000, scoped, tag = 'scratch operand']
  #allocation3 [shape = 'bf16[2,10,32]{2,1,0:T(8,128)(2,1)}', space=vmem, size = 0x2000, scoped, tag = 'scratch operand']
  #allocation4 [shape = 'bf16[2,22,32]{2,1,0:T(8,128)(2,1)}', space=vmem, size = 0x3000, scoped, tag = 'scratch operand']
  %s0 = inlined_call_operand.vmem [shape: f32[2,4,16,16], index: 0, kind: input, shape index: {}]
  %s1 = inlined_call_operand.vmem [shape: bf16[224,16], index: 1, kind: input, shape index: {}]
  %s2 = inlined_call_operand.vmem [shape: bf16[224,16], index: 2, kind: input, shape index: {}]
  %s3 = inlined_call_operand.vmem [shape: bf16[224,16], index: 3, kind: input, shape index: {}]
  %s4 = inlined_call_operand.vmem [shape: bf16[16,256], index: 4, kind: input, shape index: {}]
  %s5 = inlined_call_operand.vmem [shape: bf16[32,256], index: 5, kind: input, shape index: {}]
  %s6 = inlined_call_operand.vmem [shape: bf16[8,32], index: 6, kind: input, shape index: {}]
  %s7 = inlined_call_operand.vmem [shape: f32[3], index: 7, kind: input, shape index: {}]
  %s8 = inlined_call_operand.hbm [shape: f32[8,256], index: 8, kind: output, shape index: {}]
  %s9 = sld [smem:[#allocation0]]
  $region50: #{tpu_custom_call.1} parent=0
    _
  %s11 = ssub.s32 1, %s9
  %s12 = scalar_select 0, %s11, %s9
  $region1: #{tpu_custom_call.1} parent=0
    #allocation5 [shape = 'u8[512]{0}', space=smem, size = 0x200, scoped, tag = 'input window, operand 7, single buffered']
    #allocation6 [shape = 's32[1]{0}', space=sflag, size = 0x4, scoped, tag = 'scoped memory for tpu_custom_call.1']
    #allocation7 [shape = 's32[1]{0}', space=sflag, size = 0x4, scoped, tag = 'scoped memory for tpu_custom_call.1']
    #allocation8 [shape = 'u8[8192]{0}', space=vmem, size = 0x2000, scoped, tag = 'output window, operand 0, single buffered']
    %13 = vsyncpa [#allocation7], 0
    %14 = vsyncpa [#allocation6], 0
    // Predicated region
    $region2: #{tpu_custom_call.1} parent=1 // pred_check
      _
    $region3: #{tpu_custom_call.1} parent=1 // pred_check_branch
      %16 = sbr.rel (0) target = $region5
    $region4: #{tpu_custom_call.1} parent=1 // pred_region
      _
    $region5: #{tpu_custom_call.1} parent=1 // pred_fallthru
      _
    // Predicated region
    $region6: #{tpu_custom_call.1} parent=1 // pred_check
      _
    $region7: #{tpu_custom_call.1} parent=1 // pred_check_branch
      %18 = sbr.rel (0) target = $region9
    $region8: #{tpu_custom_call.1} parent=1 // pred_region
      _
    $region9: #{tpu_custom_call.1} parent=1 // pred_fallthru
      _
    // Predicated region
    $region10: #{tpu_custom_call.1} parent=1 // pred_check
      _
    $region11: #{tpu_custom_call.1} parent=1 // pred_check_branch
      %20 = sbr.rel (0) target = $region13
    $region12: #{tpu_custom_call.1} parent=1 // pred_region
      _
    $region13: #{tpu_custom_call.1} parent=1 // pred_fallthru
      _
    // Predicated region
    $region14: #{tpu_custom_call.1} parent=1 // pred_check
      _
    $region15: #{tpu_custom_call.1} parent=1 // pred_check_branch
      %22 = sbr.rel (0) target = $region17
    $region16: #{tpu_custom_call.1} parent=1 // pred_region
      _
    $region17: #{tpu_custom_call.1} parent=1 // pred_fallthru
      _
    // Predicated region
    $region18: #{tpu_custom_call.1} parent=1 // pred_check
      _
    $region19: #{tpu_custom_call.1} parent=1 // pred_check_branch
      %24 = sbr.rel (0) target = $region21
    $region20: #{tpu_custom_call.1} parent=1 // pred_region
      _
    $region21: #{tpu_custom_call.1} parent=1 // pred_fallthru
      _
    // Predicated region
    $region22: #{tpu_custom_call.1} parent=1 // pred_check
      _
    $region23: #{tpu_custom_call.1} parent=1 // pred_check_branch
      %26 = sbr.rel (0) target = $region25
    $region24: #{tpu_custom_call.1} parent=1 // pred_region
      _
    $region25: #{tpu_custom_call.1} parent=1 // pred_fallthru
      _
    // Predicated region
    $region26: #{tpu_custom_call.1} parent=1 // pred_check
      _
    $region27: #{tpu_custom_call.1} parent=1 // pred_check_branch
      %28 = sbr.rel (0) target = $region29
    $region28: #{tpu_custom_call.1} parent=1 // pred_region
      _
    $region29: #{tpu_custom_call.1} parent=1 // pred_fallthru
      _
    // Predicated region
    $region30: #{tpu_custom_call.1} parent=1 // pred_check
      _
    $region31: #{tpu_custom_call.1} parent=1 // pred_check_branch
      %30 = sbr.rel (0) target = $region33
    $region32: #{tpu_custom_call.1} parent=1 // pred_region
      %s32 = ssub.s32 16, 16
      %33 = vsyncadd [#allocation7], %s32
      %s35 = sshll.u32 %s7, 4
      %s36 = int_to_ptr.vmem [resolvable:$true] %s35
      %38 = dma.vmem_to_smem %s36, 16, [#allocation5], [#allocation7]
    $region33: #{tpu_custom_call.1} parent=1 // pred_fallthru
      _
    // Predicated region
    $region34: #{tpu_custom_call.1} parent=1 // pred_check
      _
    $region35: #{tpu_custom_call.1} parent=1 // pred_check_branch
      %40 = sbr.rel (0) target = $region37
    $region36: #{tpu_custom_call.1} parent=1 // pred_region
      %41 = dma.done [#allocation7], 16
    $region37: #{tpu_custom_call.1} parent=1 // pred_fallthru
      _
    %42 = sfence
    %p44 = scmp.eq.s32.totalorder 0, 0
    // Predicated region
    $region38: #{tpu_custom_call.1} parent=1 // pred_check
      %p45 = pneg %p44
    $region39: #{tpu_custom_call.1} parent=1 // pred_check_branch
      %47 = sbr.rel (%p45) target = $region41
    $region40: #{tpu_custom_call.1} parent=1 // pred_region
      %vm48 = vcmask 254976
      %vm49 = vsmask.f32 1280
      %vm50 = vmand %vm48, %vm49
      %v51 = vld [vmem:[#allocation2] sm:$0x3]
      %v52 = vsel %vm50, 0, %v51
      %53 = vst [vmem:[#allocation2] sm:$0x3] %v52
      %v54 = vld [vmem:[#allocation2 + $0x8] sm:$0x3]
      %v55 = vsel %vm50, 0, %v54
      %56 = vst [vmem:[#allocation2 + $0x8] sm:$0x3] %v55
      %vm57 = vcmask 257027
      %vm58 = vsmask.f32 7950
      %vm59 = vmand %vm57, %vm58
      %v60 = vld [vmem:[#allocation2] sm:$0x8]
      %v61 = vsel %vm59, 0, %v60
      %62 = vst [vmem:[#allocation2] sm:$0x8] %v61
      %vm63 = vcmask 253952
      %64 = vst.msk [vmem:[#allocation2 + $0x4] sm:$0x1] %vm63, 0
      %v65 = vld [vmem:[#allocation2 + $0x8] sm:$0x8]
      %v66 = vsel %vm59, 0, %v65
      %67 = vst [vmem:[#allocation2 + $0x8] sm:$0x8] %v66
      %68 = vst.msk [vmem:[#allocation2 + $0xc] sm:$0x1] %vm63, 0
      %v69 = vld [vmem:[#allocation3] sm:$0x3]
      %v70 = vsel %vm50, 0, %v69
      %71 = vst [vmem:[#allocation3] sm:$0x3] %v70
      %v72 = vld [vmem:[#allocation3 + $0x8] sm:$0x3]
      %v73 = vsel %vm50, 0, %v72
      %74 = vst [vmem:[#allocation3 + $0x8] sm:$0x3] %v73
      %v75 = vld [vmem:[#allocation3] sm:$0x8]
      %v76 = vsel %vm59, 0, %v75
      %77 = vst [vmem:[#allocation3] sm:$0x8] %v76
      %78 = vst.msk [vmem:[#allocation3 + $0x4] sm:$0x1] %vm63, 0
      %v79 = vld [vmem:[#allocation3 + $0x8] sm:$0x8]
      %v80 = vsel %vm59, 0, %v79
      %81 = vst [vmem:[#allocation3 + $0x8] sm:$0x8] %v80
      %82 = vst.msk [vmem:[#allocation3 + $0xc] sm:$0x1] %vm63, 0
      %v83 = vld [vmem:[#allocation4] sm:$0x3]
      %v84 = vsel %vm50, 0, %v83
      %85 = vst [vmem:[#allocation4] sm:$0x3] %v84
      %v86 = vld [vmem:[#allocation4 + $0xc] sm:$0x3]
      %v87 = vsel %vm50, 0, %v86
      %88 = vst [vmem:[#allocation4 + $0xc] sm:$0x3] %v87
      %vm89 = vcmask 256001
      %vm90 = vsmask.f32 7942
      %vm91 = vmand %vm89, %vm90
      %v92 = vld [vmem:[#allocation4 + $0x8] sm:$0x6]
      %v93 = vsel %vm91, 0, %v92
      %94 = vst [vmem:[#allocation4 + $0x8] sm:$0x6] %v93
      %v95 = vld [vmem:[#allocation4 + $0x14] sm:$0x6]
      %v96 = vsel %vm91, 0, %v95
      %97 = vst [vmem:[#allocation4 + $0x14] sm:$0x6] %v96
    $region41: #{tpu_custom_call.1} parent=1 // pred_fallthru
      _
    %v98 = vld [vmem:[%s0] sm:$0xff]
    %v99 = vld [vmem:[%s0 + $0x8] sm:$0xff]
    %v100 = vld [vmem:[%s0 + $0x10] sm:$0xff]
    %v101 = vld [vmem:[%s0 + $0x18] sm:$0xff]
    %v102 = vld [vmem:[%s0 + $0x20] sm:$0xff]
    %v103 = vld [vmem:[%s0 + $0x28] sm:$0xff]
    %v104 = vld [vmem:[%s0 + $0x30] sm:$0xff]
    %v105 = vld [vmem:[%s0 + $0x38] sm:$0xff]
    %v106 = vld [vmem:[%s0 + $0x40] sm:$0xff]
    %v107 = vld [vmem:[%s0 + $0x48] sm:$0xff]
    %v108 = vld [vmem:[%s0 + $0x50] sm:$0xff]
    %v109 = vld [vmem:[%s0 + $0x58] sm:$0xff]
    %v110 = vld [vmem:[%s0 + $0x60] sm:$0xff]
    %v111 = vld [vmem:[%s0 + $0x68] sm:$0xff]
    %v112 = vld [vmem:[%s0 + $0x70] sm:$0xff]
    %v113 = vld [vmem:[%s0 + $0x78] sm:$0xff]
    %vm114 = vcmask 130048
    %v115 = vsel %vm114, %v98, -inf
    %v116 = vsel %vm114, %v99, -inf
    %v117 = vmax.f32 %v115, %v116
    %v118 = vrot.slane %v117, 4
    %v119 = vmax.f32 %v117, %v118
    %v120 = vrot.slane %v119, 2
    %v121 = vmax.f32 %v119, %v120
    %v122 = vrot.slane %v121, 1
    %v123 = vmax.f32 %v121, %v122
    %v124 = vsel %vm114, %v100, -inf
    %v125 = vsel %vm114, %v101, -inf
    %v126 = vmax.f32 %v124, %v125
    %v127 = vrot.slane %v126, 4
    %v128 = vmax.f32 %v126, %v127
    %v129 = vrot.slane %v128, 2
    %v130 = vmax.f32 %v128, %v129
    %v131 = vrot.slane %v130, 1
    %v132 = vmax.f32 %v130, %v131
    %v133 = vsel %vm114, %v102, -inf
    %v134 = vsel %vm114, %v103, -inf
    %v135 = vmax.f32 %v133, %v134
    %v136 = vrot.slane %v135, 4
    %v137 = vmax.f32 %v135, %v136
    %v138 = vrot.slane %v137, 2
    %v139 = vmax.f32 %v137, %v138
    %v140 = vrot.slane %v139, 1
    %v141 = vmax.f32 %v139, %v140
    %v142 = vsel %vm114, %v104, -inf
    %v143 = vsel %vm114, %v105, -inf
    %v144 = vmax.f32 %v142, %v143
    %v145 = vrot.slane %v144, 4
    %v146 = vmax.f32 %v144, %v145
    %v147 = vrot.slane %v146, 2
    %v148 = vmax.f32 %v146, %v147
    %v149 = vrot.slane %v148, 1
    %v150 = vmax.f32 %v148, %v149
    %v151 = vsel %vm114, %v106, -inf
    %v152 = vsel %vm114, %v107, -inf
    %v153 = vmax.f32 %v151, %v152
    %v154 = vrot.slane %v153, 4
    %v155 = vmax.f32 %v153, %v154
    %v156 = vrot.slane %v155, 2
    %v157 = vmax.f32 %v155, %v156
    %v158 = vrot.slane %v157, 1
    %v159 = vmax.f32 %v157, %v158
    %v160 = vsel %vm114, %v108, -inf
    %v161 = vsel %vm114, %v109, -inf
    %v162 = vmax.f32 %v160, %v161
    %v163 = vrot.slane %v162, 4
    %v164 = vmax.f32 %v162, %v163
    %v165 = vrot.slane %v164, 2
    %v166 = vmax.f32 %v164, %v165
    %v167 = vrot.slane %v166, 1
    %v168 = vmax.f32 %v166, %v167
    %v169 = vsel %vm114, %v110, -inf
    %v170 = vsel %vm114, %v111, -inf
    %v171 = vmax.f32 %v169, %v170
    %v172 = vrot.slane %v171, 4
    %v173 = vmax.f32 %v171, %v172
    %v174 = vrot.slane %v173, 2
    %v175 = vmax.f32 %v173, %v174
    %v176 = vrot.slane %v175, 1
    %v177 = vmax.f32 %v175, %v176
    %v178 = vsel %vm114, %v112, -inf
    %v179 = vsel %vm114, %v113, -inf
    %v180 = vmax.f32 %v178, %v179
    %v181 = vrot.slane %v180, 4
    %v182 = vmax.f32 %v180, %v181
    %v183 = vrot.slane %v182, 2
    %v184 = vmax.f32 %v182, %v183
    %v185 = vrot.slane %v184, 1
    %v186 = vmax.f32 %v184, %v185
    %v187 = vpack.c.bf16 %v123, %v123
    %v188 = vpack.c.bf16 %v132, %v132
    %v189 = vpack.c.bf16 %v141, %v141
    %v190 = vpack.c.bf16 %v150, %v150
    %v191 = vpack.c.bf16 %v159, %v159
    %v192 = vpack.c.bf16 %v168, %v168
    %v193 = vpack.c.bf16 %v177, %v177
    %v194 = vpack.c.bf16 %v186, %v186
    %v203 = vunpack.c.l.b16 %v187
    %v204 = vunpack.c.l.b16 %v188
    %v205 = vunpack.c.l.b16 %v189
    %v206 = vunpack.c.l.b16 %v190
    %v207 = vunpack.c.l.b16 %v191
    %v208 = vunpack.c.l.b16 %v192
    %v209 = vunpack.c.l.b16 %v193
    %v210 = vunpack.c.l.b16 %v194
    %v211 = vpack.c.b16 %v203, %v203
    %v212 = vpack.c.b16 %v204, %v204
    %v213 = vpack.c.b16 %v205, %v205
    %v214 = vpack.c.b16 %v206, %v206
    %v215 = vpack.c.b16 %v207, %v207
    %v216 = vpack.c.b16 %v208, %v208
    %v217 = vpack.c.b16 %v209, %v209
    %v218 = vpack.c.b16 %v210, %v210
    %v219 = vunpack.c.l.b16 %v211
    %v220 = vunpack.c.l.b16 %v212
    %v221 = vunpack.c.l.b16 %v213
    %v222 = vunpack.c.l.b16 %v214
    %v223 = vunpack.c.l.b16 %v215
    %v224 = vunpack.c.l.b16 %v216
    %v225 = vunpack.c.l.b16 %v217
    %v226 = vunpack.c.l.b16 %v218
    %vm227 = vcmask 1044484
    %v228 = vsel %vm227, %v220, %v219
    %vm229 = vcmask 1045509
    %v230 = vsel %vm229, %v221, %v228
    %vm231 = vcmask 1046534
    %v232 = vsel %vm231, %v222, %v230
    %v233 = vsel %vm227, %v224, %v223
    %v234 = vsel %vm229, %v225, %v233
    %v235 = vsel %vm231, %v226, %v234
    %v236 = vpack.c.b16 %v232, %v232
    %v237 = vpack.c.b16 %v235, %v235
    %vm240 = vcmask 125953
    %vm241 = vsmask.f32 3334
    %vm242 = vmand %vm240, %vm241
    %v243 = vld [vmem:[#allocation2] sm:$0xe]
    %v244 = vsel %vm242, %v236, %v243
    %245 = vst [vmem:[#allocation2] sm:$0xe] %v244
    %v246 = vld [vmem:[#allocation2 + $0x8] sm:$0xe]
    %v247 = vsel %vm242, %v237, %v246
    %248 = vst [vmem:[#allocation2 + $0x8] sm:$0xe] %v247
    %v249 = vsel %vm114, %v98, 0.0
    %v250 = vsel %vm114, %v99, 0.0
    %v251 = vadd.f32 %v249, %v250
    %v252 = vrot.slane %v251, 4
    %v253 = vadd.f32 %v251, %v252
    %v254 = vrot.slane %v253, 2
    %v255 = vadd.f32 %v253, %v254
    %v256 = vrot.slane %v255, 1
    %v257 = vadd.f32 %v255, %v256
    %v258 = vsel %vm114, %v100, 0.0
    %v259 = vsel %vm114, %v101, 0.0
    %v260 = vadd.f32 %v258, %v259
    %v261 = vrot.slane %v260, 4
    %v262 = vadd.f32 %v260, %v261
    %v263 = vrot.slane %v262, 2
    %v264 = vadd.f32 %v262, %v263
    %v265 = vrot.slane %v264, 1
    %v266 = vadd.f32 %v264, %v265
    %v267 = vsel %vm114, %v102, 0.0
    %v268 = vsel %vm114, %v103, 0.0
    %v269 = vadd.f32 %v267, %v268
    %v270 = vrot.slane %v269, 4
    %v271 = vadd.f32 %v269, %v270
    %v272 = vrot.slane %v271, 2
    %v273 = vadd.f32 %v271, %v272
    %v274 = vrot.slane %v273, 1
    %v275 = vadd.f32 %v273, %v274
    %v276 = vsel %vm114, %v104, 0.0
    %v277 = vsel %vm114, %v105, 0.0
    %v278 = vadd.f32 %v276, %v277
    %v279 = vrot.slane %v278, 4
    %v280 = vadd.f32 %v278, %v279
    %v281 = vrot.slane %v280, 2
    %v282 = vadd.f32 %v280, %v281
    %v283 = vrot.slane %v282, 1
    %v284 = vadd.f32 %v282, %v283
    %v285 = vsel %vm114, %v106, 0.0
    %v286 = vsel %vm114, %v107, 0.0
    %v287 = vadd.f32 %v285, %v286
    %v288 = vrot.slane %v287, 4
    %v289 = vadd.f32 %v287, %v288
    %v290 = vrot.slane %v289, 2
    %v291 = vadd.f32 %v289, %v290
    %v292 = vrot.slane %v291, 1
    %v293 = vadd.f32 %v291, %v292
    %v294 = vsel %vm114, %v108, 0.0
    %v295 = vsel %vm114, %v109, 0.0
    %v296 = vadd.f32 %v294, %v295
    %v297 = vrot.slane %v296, 4
    %v298 = vadd.f32 %v296, %v297
    %v299 = vrot.slane %v298, 2
    %v300 = vadd.f32 %v298, %v299
    %v301 = vrot.slane %v300, 1
    %v302 = vadd.f32 %v300, %v301
    %v303 = vsel %vm114, %v110, 0.0
    %v304 = vsel %vm114, %v111, 0.0
    %v305 = vadd.f32 %v303, %v304
    %v306 = vrot.slane %v305, 4
    %v307 = vadd.f32 %v305, %v306
    %v308 = vrot.slane %v307, 2
    %v309 = vadd.f32 %v307, %v308
    %v310 = vrot.slane %v309, 1
    %v311 = vadd.f32 %v309, %v310
    %v312 = vsel %vm114, %v112, 0.0
    %v313 = vsel %vm114, %v113, 0.0
    %v314 = vadd.f32 %v312, %v313
    %v315 = vrot.slane %v314, 4
    %v316 = vadd.f32 %v314, %v315
    %v317 = vrot.slane %v316, 2
    %v318 = vadd.f32 %v316, %v317
    %v319 = vrot.slane %v318, 1
    %v320 = vadd.f32 %v318, %v319
    %v321 = vpack.c.bf16 %v257, %v257
    %v322 = vpack.c.bf16 %v266, %v266
    %v323 = vpack.c.bf16 %v275, %v275
    %v324 = vpack.c.bf16 %v284, %v284
    %v325 = vpack.c.bf16 %v293, %v293
    %v326 = vpack.c.bf16 %v302, %v302
    %v327 = vpack.c.bf16 %v311, %v311
    %v328 = vpack.c.bf16 %v320, %v320
    %v337 = vunpack.c.l.b16 %v321
    %v338 = vunpack.c.l.b16 %v322
    %v339 = vunpack.c.l.b16 %v323
    %v340 = vunpack.c.l.b16 %v324
    %v341 = vunpack.c.l.b16 %v325
    %v342 = vunpack.c.l.b16 %v326
    %v343 = vunpack.c.l.b16 %v327
    %v344 = vunpack.c.l.b16 %v328
    %v345 = vpack.c.b16 %v337, %v337
    %v346 = vpack.c.b16 %v338, %v338
    %v347 = vpack.c.b16 %v339, %v339
    %v348 = vpack.c.b16 %v340, %v340
    %v349 = vpack.c.b16 %v341, %v341
    %v350 = vpack.c.b16 %v342, %v342
    %v351 = vpack.c.b16 %v343, %v343
    %v352 = vpack.c.b16 %v344, %v344
    %v353 = vunpack.c.l.b16 %v345
    %v354 = vunpack.c.l.b16 %v346
    %v355 = vunpack.c.l.b16 %v347
    %v356 = vunpack.c.l.b16 %v348
    %v357 = vunpack.c.l.b16 %v349
    %v358 = vunpack.c.l.b16 %v350
    %v359 = vunpack.c.l.b16 %v351
    %v360 = vunpack.c.l.b16 %v352
    %v361 = vsel %vm227, %v354, %v353
    %v362 = vsel %vm229, %v355, %v361
    %v363 = vsel %vm231, %v356, %v362
    %v364 = vsel %vm227, %v358, %v357
    %v365 = vsel %vm229, %v359, %v364
    %v366 = vsel %vm231, %v360, %v365
    %v367 = vpack.c.b16 %v363, %v363
    %v368 = vpack.c.b16 %v366, %v366
    %369 = vrot.lane.b32.xlu0 %v367, 16
    %v370 = vpop.permute.xlu0 %369
    %371 = vrot.lane.b32.xlu0 %v368, 16
    %v372 = vpop.permute.xlu0 %371
    %vm375 = vcmask 257153
    %vm376 = vmand %vm375, %vm241
    %v377 = vld [vmem:[#allocation2] sm:$0xe]
    %v378 = vsel %vm376, %v370, %v377
    %379 = vst [vmem:[#allocation2] sm:$0xe] %v378
    %v380 = vld [vmem:[#allocation2 + $0x8] sm:$0xe]
    %v381 = vsel %vm376, %v372, %v380
    %382 = vst [vmem:[#allocation2 + $0x8] sm:$0xe] %v381
    %383 = vmax.xlane.f32.xlu0 %v115
    %v384 = vpop.xlane.xlu0 %383
    %385 = vmax.xlane.f32.xlu0 %v116
    %v386 = vpop.xlane.xlu0 %385
    %387 = vmax.xlane.f32.xlu0 %v124
    %v388 = vpop.xlane.xlu0 %387
    %389 = vmax.xlane.f32.xlu0 %v125
    %v390 = vpop.xlane.xlu0 %389
    %391 = vmax.xlane.f32.xlu0 %v133
    %v392 = vpop.xlane.xlu0 %391
    %393 = vmax.xlane.f32.xlu0 %v134
    %v394 = vpop.xlane.xlu0 %393
    %395 = vmax.xlane.f32.xlu0 %v142
    %v396 = vpop.xlane.xlu0 %395
    %397 = vmax.xlane.f32.xlu0 %v143
    %v398 = vpop.xlane.xlu0 %397
    %399 = vmax.xlane.f32.xlu0 %v151
    %v400 = vpop.xlane.xlu0 %399
    %401 = vmax.xlane.f32.xlu0 %v152
    %v402 = vpop.xlane.xlu0 %401
    %403 = vmax.xlane.f32.xlu0 %v160
    %v404 = vpop.xlane.xlu0 %403
    %405 = vmax.xlane.f32.xlu0 %v161
    %v406 = vpop.xlane.xlu0 %405
    %407 = vmax.xlane.f32.xlu0 %v169
    %v408 = vpop.xlane.xlu0 %407
    %409 = vmax.xlane.f32.xlu0 %v170
    %v410 = vpop.xlane.xlu0 %409
    %411 = vmax.xlane.f32.xlu0 %v178
    %v412 = vpop.xlane.xlu0 %411
    %413 = vmax.xlane.f32.xlu0 %v179
    %v414 = vpop.xlane.xlu0 %413
    %v415 = vpack.c.bf16 %v386, %v384
    %v416 = vpack.c.bf16 %v390, %v388
    %v417 = vpack.c.bf16 %v394, %v392
    %v418 = vpack.c.bf16 %v398, %v396
    %v419 = vpack.c.bf16 %v402, %v400
    %v420 = vpack.c.bf16 %v406, %v404
    %v421 = vpack.c.bf16 %v410, %v408
    %v422 = vpack.c.bf16 %v414, %v412
    %v432 = vunpack.c.l.s4 839922192
    %v433 = vunpack.c.0.s8 %v432
    %v434 = vlaneseq
    %v435 = vshrl.u32 %v434, 7
    %v436 = vsub.s32 %v433, %v435
    %v437 = vrot.slane %v415, %v436
    %v439 = vunpack.c.l.s4 1985246804
    %v440 = vunpack.c.0.s8 %v439
    %v441 = vlaneseq
    %v442 = vshrl.u32 %v441, 7
    %v443 = vsub.s32 %v440, %v442
    %v444 = vrot.slane %v415, %v443
    %v446 = vunpack.c.l.s4 839922192
    %v447 = vunpack.c.0.s8 %v446
    %v448 = vlaneseq
    %v449 = vshrl.u32 %v448, 7
    %v450 = vsub.s32 %v447, %v449
    %v451 = vrot.slane %v416, %v450
    %v453 = vunpack.c.l.s4 1985246804
    %v454 = vunpack.c.0.s8 %v453
    %v455 = vlaneseq
    %v456 = vshrl.u32 %v455, 7
    %v457 = vsub.s32 %v454, %v456
    %v458 = vrot.slane %v416, %v457
    %v460 = vunpack.c.l.s4 839922192
    %v461 = vunpack.c.0.s8 %v460
    %v462 = vlaneseq
    %v463 = vshrl.u32 %v462, 7
    %v464 = vsub.s32 %v461, %v463
    %v465 = vrot.slane %v417, %v464
    %v467 = vunpack.c.l.s4 1985246804
    %v468 = vunpack.c.0.s8 %v467
    %v469 = vlaneseq
    %v470 = vshrl.u32 %v469, 7
    %v471 = vsub.s32 %v468, %v470
    %v472 = vrot.slane %v417, %v471
    %v474 = vunpack.c.l.s4 839922192
    %v475 = vunpack.c.0.s8 %v474
    %v476 = vlaneseq
    %v477 = vshrl.u32 %v476, 7
    %v478 = vsub.s32 %v475, %v477
    %v479 = vrot.slane %v418, %v478
    %v481 = vunpack.c.l.s4 1985246804
    %v482 = vunpack.c.0.s8 %v481
    %v483 = vlaneseq
    %v484 = vshrl.u32 %v483, 7
    %v485 = vsub.s32 %v482, %v484
    %v486 = vrot.slane %v418, %v485
    %v488 = vunpack.c.l.s4 839922192
    %v489 = vunpack.c.0.s8 %v488
    %v490 = vlaneseq
    %v491 = vshrl.u32 %v490, 7
    %v492 = vsub.s32 %v489, %v491
    %v493 = vrot.slane %v419, %v492
    %v495 = vunpack.c.l.s4 1985246804
    %v496 = vunpack.c.0.s8 %v495
    %v497 = vlaneseq
    %v498 = vshrl.u32 %v497, 7
    %v499 = vsub.s32 %v496, %v498
    %v500 = vrot.slane %v419, %v499
    %v502 = vunpack.c.l.s4 839922192
    %v503 = vunpack.c.0.s8 %v502
    %v504 = vlaneseq
    %v505 = vshrl.u32 %v504, 7
    %v506 = vsub.s32 %v503, %v505
    %v507 = vrot.slane %v420, %v506
    %v509 = vunpack.c.l.s4 1985246804
    %v510 = vunpack.c.0.s8 %v509
    %v511 = vlaneseq
    %v512 = vshrl.u32 %v511, 7
    %v513 = vsub.s32 %v510, %v512
    %v514 = vrot.slane %v420, %v513
    %v516 = vunpack.c.l.s4 839922192
    %v517 = vunpack.c.0.s8 %v516
    %v518 = vlaneseq
    %v519 = vshrl.u32 %v518, 7
    %v520 = vsub.s32 %v517, %v519
    %v521 = vrot.slane %v421, %v520
    %v523 = vunpack.c.l.s4 1985246804
    %v524 = vunpack.c.0.s8 %v523
    %v525 = vlaneseq
    %v526 = vshrl.u32 %v525, 7
    %v527 = vsub.s32 %v524, %v526
    %v528 = vrot.slane %v421, %v527
    %v530 = vunpack.c.l.s4 839922192
    %v531 = vunpack.c.0.s8 %v530
    %v532 = vlaneseq
    %v533 = vshrl.u32 %v532, 7
    %v534 = vsub.s32 %v531, %v533
    %v535 = vrot.slane %v422, %v534
    %v537 = vunpack.c.l.s4 1985246804
    %v538 = vunpack.c.0.s8 %v537
    %v539 = vlaneseq
    %v540 = vshrl.u32 %v539, 7
    %v541 = vsub.s32 %v538, %v540
    %v542 = vrot.slane %v422, %v541
    %v543 = vunpack.c.l.b16 %v437
    %v544 = vunpack.c.l.b16 %v444
    %v545 = vunpack.c.l.b16 %v451
    %v546 = vunpack.c.l.b16 %v458
    %v547 = vunpack.c.l.b16 %v465
    %v548 = vunpack.c.l.b16 %v472
    %v549 = vunpack.c.l.b16 %v479
    %v550 = vunpack.c.l.b16 %v486
    %v551 = vunpack.c.l.b16 %v493
    %v552 = vunpack.c.l.b16 %v500
    %v553 = vunpack.c.l.b16 %v507
    %v554 = vunpack.c.l.b16 %v514
    %v555 = vunpack.c.l.b16 %v521
    %v556 = vunpack.c.l.b16 %v528
    %v557 = vunpack.c.l.b16 %v535
    %v558 = vunpack.c.l.b16 %v542
    %v559 = vlaneseq
    %v560 = vand.u32 %v559, 127
    %v561 = vlaneseq
    %v562 = vshrl.u32 %v561, 7
    %v563 = vsub.s32 %v560, %v562
    %v564 = vrot.slane %v543, %v563
    %v565 = vadd.s32 %v560, 4294967288
    %v566 = vlaneseq
    %v567 = vshrl.u32 %v566, 7
    %v568 = vsub.s32 %v565, %v567
    %v569 = vrot.slane %v544, %v568
    %vm570 = vcmask 130112
    %v571 = vsel %vm570, %v569, %v564
    %v572 = vlaneseq
    %v573 = vshrl.u32 %v572, 7
    %v574 = vsub.s32 %v560, %v573
    %v575 = vrot.slane %v545, %v574
    %v576 = vlaneseq
    %v577 = vshrl.u32 %v576, 7
    %v578 = vsub.s32 %v565, %v577
    %v579 = vrot.slane %v546, %v578
    %v580 = vsel %vm570, %v579, %v575
    %v581 = vlaneseq
    %v582 = vshrl.u32 %v581, 7
    %v583 = vsub.s32 %v560, %v582
    %v584 = vrot.slane %v547, %v583
    %v585 = vlaneseq
    %v586 = vshrl.u32 %v585, 7
    %v587 = vsub.s32 %v565, %v586
    %v588 = vrot.slane %v548, %v587
    %v589 = vsel %vm570, %v588, %v584
    %v590 = vlaneseq
    %v591 = vshrl.u32 %v590, 7
    %v592 = vsub.s32 %v560, %v591
    %v593 = vrot.slane %v549, %v592
    %v594 = vlaneseq
    %v595 = vshrl.u32 %v594, 7
    %v596 = vsub.s32 %v565, %v595
    %v597 = vrot.slane %v550, %v596
    %v598 = vsel %vm570, %v597, %v593
    %v599 = vlaneseq
    %v600 = vshrl.u32 %v599, 7
    %v601 = vsub.s32 %v560, %v600
    %v602 = vrot.slane %v551, %v601
    %v603 = vlaneseq
    %v604 = vshrl.u32 %v603, 7
    %v605 = vsub.s32 %v565, %v604
    %v606 = vrot.slane %v552, %v605
    %v607 = vsel %vm570, %v606, %v602
    %v608 = vlaneseq
    %v609 = vshrl.u32 %v608, 7
    %v610 = vsub.s32 %v560, %v609
    %v611 = vrot.slane %v553, %v610
    %v612 = vlaneseq
    %v613 = vshrl.u32 %v612, 7
    %v614 = vsub.s32 %v565, %v613
    %v615 = vrot.slane %v554, %v614
    %v616 = vsel %vm570, %v615, %v611
    %v617 = vlaneseq
    %v618 = vshrl.u32 %v617, 7
    %v619 = vsub.s32 %v560, %v618
    %v620 = vrot.slane %v555, %v619
    %v621 = vlaneseq
    %v622 = vshrl.u32 %v621, 7
    %v623 = vsub.s32 %v565, %v622
    %v624 = vrot.slane %v556, %v623
    %v625 = vsel %vm570, %v624, %v620
    %v626 = vlaneseq
    %v627 = vshrl.u32 %v626, 7
    %v628 = vsub.s32 %v560, %v627
    %v629 = vrot.slane %v557, %v628
    %v630 = vlaneseq
    %v631 = vshrl.u32 %v630, 7
    %v632 = vsub.s32 %v565, %v631
    %v633 = vrot.slane %v558, %v632
    %v634 = vsel %vm570, %v633, %v629
    %v635 = vsel %vm227, %v580, %v571
    %v636 = vsel %vm229, %v589, %v635
    %v637 = vsel %vm231, %v598, %v636
    %v638 = vsel %vm227, %v616, %v607
    %v639 = vsel %vm229, %v625, %v638
    %v640 = vsel %vm231, %v634, %v639
    %v641 = vpack.c.b16 %v637, %v637
    %v642 = vpack.c.b16 %v640, %v640
    %v645 = vld [vmem:[#allocation3] sm:$0xe]
    %v646 = vsel %vm242, %v641, %v645
    %647 = vst [vmem:[#allocation3] sm:$0xe] %v646
    %v648 = vld [vmem:[#allocation3 + $0x8] sm:$0xe]
    %v649 = vsel %vm242, %v642, %v648
    %650 = vst [vmem:[#allocation3 + $0x8] sm:$0xe] %v649
    %651 = vadd.xlane.f32.xlu0 %v249
    %v652 = vpop.xlane.xlu0 %651
    %653 = vadd.xlane.f32.xlu0 %v250
    %v654 = vpop.xlane.xlu0 %653
    %655 = vadd.xlane.f32.xlu0 %v258
    %v656 = vpop.xlane.xlu0 %655
    %657 = vadd.xlane.f32.xlu0 %v259
    %v658 = vpop.xlane.xlu0 %657
    %659 = vadd.xlane.f32.xlu0 %v267
    %v660 = vpop.xlane.xlu0 %659
    %661 = vadd.xlane.f32.xlu0 %v268
    %v662 = vpop.xlane.xlu0 %661
    %663 = vadd.xlane.f32.xlu0 %v276
    %v664 = vpop.xlane.xlu0 %663
    %665 = vadd.xlane.f32.xlu0 %v277
    %v666 = vpop.xlane.xlu0 %665
    %667 = vadd.xlane.f32.xlu0 %v285
    %v668 = vpop.xlane.xlu0 %667
    %669 = vadd.xlane.f32.xlu0 %v286
    %v670 = vpop.xlane.xlu0 %669
    %671 = vadd.xlane.f32.xlu0 %v294
    %v672 = vpop.xlane.xlu0 %671
    %673 = vadd.xlane.f32.xlu0 %v295
    %v674 = vpop.xlane.xlu0 %673
    %675 = vadd.xlane.f32.xlu0 %v303
    %v676 = vpop.xlane.xlu0 %675
    %677 = vadd.xlane.f32.xlu0 %v304
    %v678 = vpop.xlane.xlu0 %677
    %679 = vadd.xlane.f32.xlu0 %v312
    %v680 = vpop.xlane.xlu0 %679
    %681 = vadd.xlane.f32.xlu0 %v313
    %v682 = vpop.xlane.xlu0 %681
    %v683 = vpack.c.bf16 %v654, %v652
    %v684 = vpack.c.bf16 %v658, %v656
    %v685 = vpack.c.bf16 %v662, %v660
    %v686 = vpack.c.bf16 %v666, %v664
    %v687 = vpack.c.bf16 %v670, %v668
    %v688 = vpack.c.bf16 %v674, %v672
    %v689 = vpack.c.bf16 %v678, %v676
    %v690 = vpack.c.bf16 %v682, %v680
    %v700 = vunpack.c.l.s4 839922192
    %v701 = vunpack.c.0.s8 %v700
    %v702 = vlaneseq
    %v703 = vshrl.u32 %v702, 7
    %v704 = vsub.s32 %v701, %v703
    %v705 = vrot.slane %v683, %v704
    %v707 = vunpack.c.l.s4 1985246804
    %v708 = vunpack.c.0.s8 %v707
    %v709 = vlaneseq
    %v710 = vshrl.u32 %v709, 7
    %v711 = vsub.s32 %v708, %v710
    %v712 = vrot.slane %v683, %v711
    %v714 = vunpack.c.l.s4 839922192
    %v715 = vunpack.c.0.s8 %v714
    %v716 = vlaneseq
    %v717 = vshrl.u32 %v716, 7
    %v718 = vsub.s32 %v715, %v717
    %v719 = vrot.slane %v684, %v718
    %v721 = vunpack.c.l.s4 1985246804
    %v722 = vunpack.c.0.s8 %v721
    %v723 = vlaneseq
    %v724 = vshrl.u32 %v723, 7
    %v725 = vsub.s32 %v722, %v724
    %v726 = vrot.slane %v684, %v725
    %v728 = vunpack.c.l.s4 839922192
    %v729 = vunpack.c.0.s8 %v728
    %v730 = vlaneseq
    %v731 = vshrl.u32 %v730, 7
    %v732 = vsub.s32 %v729, %v731
    %v733 = vrot.slane %v685, %v732
    %v735 = vunpack.c.l.s4 1985246804
    %v736 = vunpack.c.0.s8 %v735
    %v737 = vlaneseq
    %v738 = vshrl.u32 %v737, 7
    %v739 = vsub.s32 %v736, %v738
    %v740 = vrot.slane %v685, %v739
    %v742 = vunpack.c.l.s4 839922192
    %v743 = vunpack.c.0.s8 %v742
    %v744 = vlaneseq
    %v745 = vshrl.u32 %v744, 7
    %v746 = vsub.s32 %v743, %v745
    %v747 = vrot.slane %v686, %v746
    %v749 = vunpack.c.l.s4 1985246804
    %v750 = vunpack.c.0.s8 %v749
    %v751 = vlaneseq
    %v752 = vshrl.u32 %v751, 7
    %v753 = vsub.s32 %v750, %v752
    %v754 = vrot.slane %v686, %v753
    %v756 = vunpack.c.l.s4 839922192
    %v757 = vunpack.c.0.s8 %v756
    %v758 = vlaneseq
    %v759 = vshrl.u32 %v758, 7
    %v760 = vsub.s32 %v757, %v759
    %v761 = vrot.slane %v687, %v760
    %v763 = vunpack.c.l.s4 1985246804
    %v764 = vunpack.c.0.s8 %v763
    %v765 = vlaneseq
    %v766 = vshrl.u32 %v765, 7
    %v767 = vsub.s32 %v764, %v766
    %v768 = vrot.slane %v687, %v767
    %v770 = vunpack.c.l.s4 839922192
    %v771 = vunpack.c.0.s8 %v770
    %v772 = vlaneseq
    %v773 = vshrl.u32 %v772, 7
    %v774 = vsub.s32 %v771, %v773
    %v775 = vrot.slane %v688, %v774
    %v777 = vunpack.c.l.s4 1985246804
    %v778 = vunpack.c.0.s8 %v777
    %v779 = vlaneseq
    %v780 = vshrl.u32 %v779, 7
    %v781 = vsub.s32 %v778, %v780
    %v782 = vrot.slane %v688, %v781
    %v784 = vunpack.c.l.s4 839922192
    %v785 = vunpack.c.0.s8 %v784
    %v786 = vlaneseq
    %v787 = vshrl.u32 %v786, 7
    %v788 = vsub.s32 %v785, %v787
    %v789 = vrot.slane %v689, %v788
    %v791 = vunpack.c.l.s4 1985246804
    %v792 = vunpack.c.0.s8 %v791
    %v793 = vlaneseq
    %v794 = vshrl.u32 %v793, 7
    %v795 = vsub.s32 %v792, %v794
    %v796 = vrot.slane %v689, %v795
    %v798 = vunpack.c.l.s4 839922192
    %v799 = vunpack.c.0.s8 %v798
    %v800 = vlaneseq
    %v801 = vshrl.u32 %v800, 7
    %v802 = vsub.s32 %v799, %v801
    %v803 = vrot.slane %v690, %v802
    %v805 = vunpack.c.l.s4 1985246804
    %v806 = vunpack.c.0.s8 %v805
    %v807 = vlaneseq
    %v808 = vshrl.u32 %v807, 7
    %v809 = vsub.s32 %v806, %v808
    %v810 = vrot.slane %v690, %v809
    %v811 = vunpack.c.l.b16 %v705
    %v812 = vunpack.c.l.b16 %v712
    %v813 = vunpack.c.l.b16 %v719
    %v814 = vunpack.c.l.b16 %v726
    %v815 = vunpack.c.l.b16 %v733
    %v816 = vunpack.c.l.b16 %v740
    %v817 = vunpack.c.l.b16 %v747
    %v818 = vunpack.c.l.b16 %v754
    %v819 = vunpack.c.l.b16 %v761
    %v820 = vunpack.c.l.b16 %v768
    %v821 = vunpack.c.l.b16 %v775
    %v822 = vunpack.c.l.b16 %v782
    %v823 = vunpack.c.l.b16 %v789
    %v824 = vunpack.c.l.b16 %v796
    %v825 = vunpack.c.l.b16 %v803
    %v826 = vunpack.c.l.b16 %v810
    %v827 = vadd.s32 %v560, 4294967280
    %v828 = vlaneseq
    %v829 = vshrl.u32 %v828, 7
    %v830 = vsub.s32 %v827, %v829
    %v831 = vrot.slane %v811, %v830
    %v832 = vadd.s32 %v560, 4294967272
    %v833 = vlaneseq
    %v834 = vshrl.u32 %v833, 7
    %v835 = vsub.s32 %v832, %v834
    %v836 = vrot.slane %v812, %v835
    %vm837 = vcmask 261312
    %v838 = vsel %vm837, %v836, %v831
    %v839 = vlaneseq
    %v840 = vshrl.u32 %v839, 7
    %v841 = vsub.s32 %v827, %v840
    %v842 = vrot.slane %v813, %v841
    %v843 = vlaneseq
    %v844 = vshrl.u32 %v843, 7
    %v845 = vsub.s32 %v832, %v844
    %v846 = vrot.slane %v814, %v845
    %v847 = vsel %vm837, %v846, %v842
    %v848 = vlaneseq
    %v849 = vshrl.u32 %v848, 7
    %v850 = vsub.s32 %v827, %v849
    %v851 = vrot.slane %v815, %v850
    %v852 = vlaneseq
    %v853 = vshrl.u32 %v852, 7
    %v854 = vsub.s32 %v832, %v853
    %v855 = vrot.slane %v816, %v854
    %v856 = vsel %vm837, %v855, %v851
    %v857 = vlaneseq
    %v858 = vshrl.u32 %v857, 7
    %v859 = vsub.s32 %v827, %v858
    %v860 = vrot.slane %v817, %v859
    %v861 = vlaneseq
    %v862 = vshrl.u32 %v861, 7
    %v863 = vsub.s32 %v832, %v862
    %v864 = vrot.slane %v818, %v863
    %v865 = vsel %vm837, %v864, %v860
    %v866 = vlaneseq
    %v867 = vshrl.u32 %v866, 7
    %v868 = vsub.s32 %v827, %v867
    %v869 = vrot.slane %v819, %v868
    %v870 = vlaneseq
    %v871 = vshrl.u32 %v870, 7
    %v872 = vsub.s32 %v832, %v871
    %v873 = vrot.slane %v820, %v872
    %v874 = vsel %vm837, %v873, %v869
    %v875 = vlaneseq
    %v876 = vshrl.u32 %v875, 7
    %v877 = vsub.s32 %v827, %v876
    %v878 = vrot.slane %v821, %v877
    %v879 = vlaneseq
    %v880 = vshrl.u32 %v879, 7
    %v881 = vsub.s32 %v832, %v880
    %v882 = vrot.slane %v822, %v881
    %v883 = vsel %vm837, %v882, %v878
    %v884 = vlaneseq
    %v885 = vshrl.u32 %v884, 7
    %v886 = vsub.s32 %v827, %v885
    %v887 = vrot.slane %v823, %v886
    %v888 = vlaneseq
    %v889 = vshrl.u32 %v888, 7
    %v890 = vsub.s32 %v832, %v889
    %v891 = vrot.slane %v824, %v890
    %v892 = vsel %vm837, %v891, %v887
    %v893 = vlaneseq
    %v894 = vshrl.u32 %v893, 7
    %v895 = vsub.s32 %v827, %v894
    %v896 = vrot.slane %v825, %v895
    %v897 = vlaneseq
    %v898 = vshrl.u32 %v897, 7
    %v899 = vsub.s32 %v832, %v898
    %v900 = vrot.slane %v826, %v899
    %v901 = vsel %vm837, %v900, %v896
    %v902 = vsel %vm227, %v847, %v838
    %v903 = vsel %vm229, %v856, %v902
    %v904 = vsel %vm231, %v865, %v903
    %v905 = vsel %vm227, %v883, %v874
    %v906 = vsel %vm229, %v892, %v905
    %v907 = vsel %vm231, %v901, %v906
    %v908 = vpack.c.b16 %v904, %v904
    %v909 = vpack.c.b16 %v907, %v907
    %v912 = vld [vmem:[#allocation3] sm:$0xe]
    %v913 = vsel %vm376, %v908, %v912
    %914 = vst [vmem:[#allocation3] sm:$0xe] %v913
    %v915 = vld [vmem:[#allocation3 + $0x8] sm:$0xe]
    %v916 = vsel %vm376, %v909, %v915
    %917 = vst [vmem:[#allocation3 + $0x8] sm:$0xe] %v916
    %v918 = vmax.f32 %v115, %v124
    %v919 = vmax.f32 %v918, %v133
    %v920 = vmax.f32 %v919, %v142
    %v921 = vmax.f32 %v116, %v125
    %v922 = vmax.f32 %v921, %v134
    %v923 = vmax.f32 %v922, %v143
    %v924 = vmax.f32 %v151, %v160
    %v925 = vmax.f32 %v924, %v169
    %v926 = vmax.f32 %v925, %v178
    %v927 = vmax.f32 %v152, %v161
    %v928 = vmax.f32 %v927, %v170
    %v929 = vmax.f32 %v928, %v179
    %v930 = vpack.c.bf16 %v923, %v920
    %v931 = vpack.c.bf16 %v929, %v926
    %v934 = vunpack.c.l.b16 %v930
    %v935 = vunpack.c.h.b16 %v930
    %v936 = vunpack.c.l.b16 %v931
    %v937 = vunpack.c.h.b16 %v931
    %v938 = vpack.c.b16 %v934, %v934
    %v939 = vpack.c.b16 %v935, %v935
    %v940 = vpack.c.b16 %v936, %v936
    %v941 = vpack.c.b16 %v937, %v937
    %vm942 = vsmask.f32 1280
    %vm943 = vsmask.f32 5392
    %vm944 = vmor %vm942, %vm943
    %v946 = vshrl.u32 %v938, 16
    %v948 = vrot.slane %v946, 6
    %v949 = vshll.u32 %v938, 16
    %v951 = vrot.slane %v949, 7
    %v952 = vor.u32 %v948, %v951
    %v953 = vrot.slane %v952, 4
    %v955 = vshrl.u32 %v939, 16
    %v957 = vrot.slane %v955, 6
    %v958 = vshll.u32 %v939, 16
    %v960 = vrot.slane %v958, 7
    %v961 = vor.u32 %v957, %v960
    %v962 = vsel %vm944, %v953, %v961
    %v963 = vrot.slane %v961, 4
    %v965 = vshrl.u32 %v940, 16
    %v967 = vrot.slane %v965, 6
    %v968 = vshll.u32 %v940, 16
    %v970 = vrot.slane %v968, 7
    %v971 = vor.u32 %v967, %v970
    %v972 = vrot.slane %v971, 4
    %v974 = vshrl.u32 %v941, 16
    %v976 = vrot.slane %v974, 6
    %v977 = vshll.u32 %v941, 16
    %v979 = vrot.slane %v977, 7
    %v980 = vor.u32 %v976, %v979
    %v981 = vsel %vm944, %v972, %v980
    %v982 = vrot.slane %v980, 4
    %vm989 = vsmask.f32 7942
    %vm990 = vmand %vm240, %vm989
    %v991 = vld [vmem:[#allocation4] sm:$0xe]
    %v992 = vsel %vm990, %v952, %v991
    %993 = vst [vmem:[#allocation4] sm:$0xe] %v992
    %vm994 = vcmask 125952
    %995 = vst.msk [vmem:[#allocation4 + $0x4] sm:$0xf] %vm994, %v962
    %vm996 = vcmask 123904
    %vm997 = vmand %vm996, %vm942
    %v998 = vld [vmem:[#allocation4 + $0x8] sm:$0x3]
    %v999 = vsel %vm997, %v963, %v998
    %1000 = vst [vmem:[#allocation4 + $0x8] sm:$0x3] %v999
    %v1001 = vld [vmem:[#allocation4 + $0xc] sm:$0xe]
    %v1002 = vsel %vm990, %v971, %v1001
    %1003 = vst [vmem:[#allocation4 + $0xc] sm:$0xe] %v1002
    %1004 = vst.msk [vmem:[#allocation4 + $0x10] sm:$0xf] %vm994, %v981
    %v1005 = vld [vmem:[#allocation4 + $0x14] sm:$0x3]
    %v1006 = vsel %vm997, %v982, %v1005
    %1007 = vst [vmem:[#allocation4 + $0x14] sm:$0x3] %v1006
    %v1008 = vadd.f32 %v249, %v258
    %v1009 = vadd.f32 %v1008, %v267
    %v1010 = vadd.f32 %v1009, %v276
    %v1011 = vadd.f32 %v250, %v259
    %v1012 = vadd.f32 %v1011, %v268
    %v1013 = vadd.f32 %v1012, %v277
    %v1014 = vadd.f32 %v285, %v294
    %v1015 = vadd.f32 %v1014, %v303
    %v1016 = vadd.f32 %v1015, %v312
    %v1017 = vadd.f32 %v286, %v295
    %v1018 = vadd.f32 %v1017, %v304
    %v1019 = vadd.f32 %v1018, %v313
    %v1020 = vpack.c.bf16 %v1013, %v1010
    %v1021 = vpack.c.bf16 %v1019, %v1016
    %v1024 = vunpack.c.l.b16 %v1020
    %v1025 = vunpack.c.h.b16 %v1020
    %v1026 = vunpack.c.l.b16 %v1021
    %v1027 = vunpack.c.h.b16 %v1021
    %v1028 = vpack.c.b16 %v1024, %v1024
    %v1029 = vpack.c.b16 %v1025, %v1025
    %v1030 = vpack.c.b16 %v1026, %v1026
    %v1031 = vpack.c.b16 %v1027, %v1027
    %v1033 = vshrl.u32 %v1028, 16
    %v1035 = vrot.slane %v1033, 6
    %v1036 = vshll.u32 %v1028, 16
    %v1038 = vrot.slane %v1036, 7
    %v1039 = vor.u32 %v1035, %v1038
    %v1040 = vrot.slane %v1039, 4
    %v1042 = vshrl.u32 %v1029, 16
    %v1044 = vrot.slane %v1042, 6
    %v1045 = vshll.u32 %v1029, 16
    %v1047 = vrot.slane %v1045, 7
    %v1048 = vor.u32 %v1044, %v1047
    %v1049 = vsel %vm944, %v1040, %v1048
    %v1050 = vrot.slane %v1048, 4
    %v1052 = vshrl.u32 %v1030, 16
    %v1054 = vrot.slane %v1052, 6
    %v1055 = vshll.u32 %v1030, 16
    %v1057 = vrot.slane %v1055, 7
    %v1058 = vor.u32 %v1054, %v1057
    %v1059 = vrot.slane %v1058, 4
    %v1061 = vshrl.u32 %v1031, 16
    %v1063 = vrot.slane %v1061, 6
    %v1064 = vshll.u32 %v1031, 16
    %v1066 = vrot.slane %v1064, 7
    %v1067 = vor.u32 %v1063, %v1066
    %v1068 = vsel %vm944, %v1059, %v1067
    %v1069 = vrot.slane %v1067, 4
    %1070 = vrot.lane.b32.xlu0 %v1039, 16
    %v1071 = vpop.permute.xlu0 %1070
    %1072 = vrot.lane.b32.xlu0 %v1049, 16
    %v1073 = vpop.permute.xlu0 %1072
    %1074 = vrot.lane.b32.xlu0 %v1050, 16
    %v1075 = vpop.permute.xlu0 %1074
    %1076 = vrot.lane.b32.xlu0 %v1058, 16
    %v1077 = vpop.permute.xlu0 %1076
    %1078 = vrot.lane.b32.xlu0 %v1068, 16
    %v1079 = vpop.permute.xlu0 %1078
    %1080 = vrot.lane.b32.xlu0 %v1069, 16
    %v1081 = vpop.permute.xlu0 %1080
    %vm1088 = vmand %vm375, %vm989
    %v1089 = vld [vmem:[#allocation4] sm:$0xe]
    %v1090 = vsel %vm1088, %v1071, %v1089
    %1091 = vst [vmem:[#allocation4] sm:$0xe] %v1090
    %vm1092 = vcmask 257152
    %1093 = vst.msk [vmem:[#allocation4 + $0x4] sm:$0xf] %vm1092, %v1073
    %vm1094 = vcmask 255104
    %vm1095 = vmand %vm1094, %vm942
    %v1096 = vld [vmem:[#allocation4 + $0x8] sm:$0x3]
    %v1097 = vsel %vm1095, %v1075, %v1096
    %1098 = vst [vmem:[#allocation4 + $0x8] sm:$0x3] %v1097
    %v1099 = vld [vmem:[#allocation4 + $0xc] sm:$0xe]
    %v1100 = vsel %vm1088, %v1077, %v1099
    %1101 = vst [vmem:[#allocation4 + $0xc] sm:$0xe] %v1100
    %1102 = vst.msk [vmem:[#allocation4 + $0x10] sm:$0xf] %vm1092, %v1079
    %v1103 = vld [vmem:[#allocation4 + $0x14] sm:$0x3]
    %v1104 = vsel %vm1095, %v1081, %v1103
    %1105 = vst [vmem:[#allocation4 + $0x14] sm:$0x3] %v1104
    %s1106 = sld [smem:[#allocation5]]
    %v1107 = vld [vmem:[#allocation2] sm:$0x3]
    %v1108 = vld [vmem:[#allocation2] sm:$0x7]
    %v1109 = vld [vmem:[#allocation2] sm:$0x6]
    %v1110 = vld [vmem:[#allocation2] sm:$0xe]
    %v1111 = vld [vmem:[#allocation2] sm:$0xc]
    %v1112 = vld [vmem:[#allocation2 + $0x4] sm:$0x1]
    %v1113 = vld [vmem:[#allocation2] sm:$0x8]
    %v1115 = vunpack.c.l.b16 %v1108
    %v1116 = vpack.c.b16 %v1115, %v1115
    %v1118 = vshrl.u32 %v1116, 16
    %v1120 = vshll.u32 %v1116, 16
    %v1122 = vrot.slane %v1120, 1
    %v1123 = vor.u32 %v1118, %v1122
    %1124 = vrot.lane.b32.xlu0 %v1123, 32
    %v1125 = vpop.permute.xlu0 %1124
    %v1127 = vunpack.c.l.b16 %v1109
    %v1128 = vpack.c.b16 %v1127, %v1127
    %v1129 = vrot.slane %v1128, 1
    %1130 = vrot.lane.b32.xlu0 %v1129, 64
    %v1131 = vpop.permute.xlu0 %1130
    %v1133 = vunpack.c.l.b16 %v1110
    %v1134 = vpack.c.b16 %v1133, %v1133
    %v1136 = vshrl.u32 %v1134, 16
    %v1138 = vrot.slane %v1136, 1
    %v1139 = vshll.u32 %v1134, 16
    %v1141 = vrot.slane %v1139, 2
    %v1142 = vor.u32 %v1138, %v1141
    %1143 = vrot.lane.b32.xlu0 %v1142, 96
    %v1144 = vpop.permute.xlu0 %1143
    %v1146 = vunpack.c.l.b16 %v1111
    %v1147 = vpack.c.b16 %v1146, %v1146
    %v1148 = vrot.slane %v1147, 2
    %v1150 = vunpack.c.l.b16 %v1112
    %v1151 = vpack.c.b16 %v1150, %v1146
    %v1153 = vshrl.u32 %v1151, 16
    %v1155 = vrot.slane %v1153, 2
    %v1156 = vshll.u32 %v1151, 16
    %v1158 = vrot.slane %v1156, 3
    %v1159 = vor.u32 %v1155, %v1158
    %1160 = vrot.lane.b32.xlu0 %v1159, 32
    %v1161 = vpop.permute.xlu0 %1160
    %v1163 = vunpack.c.l.b16 %v1113
    %v1164 = vpack.c.b16 %v1150, %v1163
    %v1165 = vrot.slane %v1164, 3
    %1166 = vrot.lane.b32.xlu0 %v1165, 64
    %v1167 = vpop.permute.xlu0 %1166
    %vm1168 = vcmask 261120
    %v1171 = vsel %vm1168, %v1107, %v1125
    %vm1172 = vcmask 523264
    %v1174 = vsel %vm1172, %v1171, %v1131
    %vm1175 = vcmask 785408
    %v1177 = vsel %vm1175, %v1174, %v1144
    %v1180 = vsel %vm1168, %v1148, %v1161
    %v1182 = vsel %vm1172, %v1180, %v1167
    %s1183 = scalar_lea.vmem [#allocation2], 8
    %v1184 = vld [vmem:[%s1183] sm:$0x3]
    %v1185 = vld [vmem:[%s1183] sm:$0x7]
    %v1186 = vld [vmem:[%s1183] sm:$0x6]
    %v1187 = vld [vmem:[%s1183] sm:$0xe]
    %v1188 = vld [vmem:[%s1183] sm:$0xc]
    %v1189 = vld [vmem:[%s1183 + $0x4] sm:$0x1]
    %v1190 = vld [vmem:[%s1183] sm:$0x8]
    %v1192 = vunpack.c.l.b16 %v1185
    %v1193 = vpack.c.b16 %v1192, %v1192
    %v1195 = vshrl.u32 %v1193, 16
    %v1197 = vshll.u32 %v1193, 16
    %v1199 = vrot.slane %v1197, 1
    %v1200 = vor.u32 %v1195, %v1199
    %1201 = vrot.lane.b32.xlu0 %v1200, 32
    %v1202 = vpop.permute.xlu0 %1201
    %v1204 = vunpack.c.l.b16 %v1186
    %v1205 = vpack.c.b16 %v1204, %v1204
    %v1206 = vrot.slane %v1205, 1
    %1207 = vrot.lane.b32.xlu0 %v1206, 64
    %v1208 = vpop.permute.xlu0 %1207
    %v1210 = vunpack.c.l.b16 %v1187
    %v1211 = vpack.c.b16 %v1210, %v1210
    %v1213 = vshrl.u32 %v1211, 16
    %v1215 = vrot.slane %v1213, 1
    %v1216 = vshll.u32 %v1211, 16
    %v1218 = vrot.slane %v1216, 2
    %v1219 = vor.u32 %v1215, %v1218
    %1220 = vrot.lane.b32.xlu0 %v1219, 96
    %v1221 = vpop.permute.xlu0 %1220
    %v1223 = vunpack.c.l.b16 %v1188
    %v1224 = vpack.c.b16 %v1223, %v1223
    %v1225 = vrot.slane %v1224, 2
    %v1227 = vunpack.c.l.b16 %v1189
    %v1228 = vpack.c.b16 %v1227, %v1223
    %v1230 = vshrl.u32 %v1228, 16
    %v1232 = vrot.slane %v1230, 2
    %v1233 = vshll.u32 %v1228, 16
    %v1235 = vrot.slane %v1233, 3
    %v1236 = vor.u32 %v1232, %v1235
    %1237 = vrot.lane.b32.xlu0 %v1236, 32
    %v1238 = vpop.permute.xlu0 %1237
    %v1240 = vunpack.c.l.b16 %v1190
    %v1241 = vpack.c.b16 %v1227, %v1240
    %v1242 = vrot.slane %v1241, 3
    %1243 = vrot.lane.b32.xlu0 %v1242, 64
    %v1244 = vpop.permute.xlu0 %1243
    %v1247 = vsel %vm1168, %v1184, %v1202
    %v1249 = vsel %vm1172, %v1247, %v1208
    %v1251 = vsel %vm1175, %v1249, %v1221
    %v1254 = vsel %vm1168, %v1225, %v1238
    %v1256 = vsel %vm1172, %v1254, %v1244
    %v1259 = vrot.slane %v1251, 6
    %v1260 = vrot.slane %v1256, 6
    %vm1261 = vcmask 1041408
    %v1263 = vsel %vm1261, %v1177, %v1259
    %v1266 = vsel %vm1261, %v1182, %v1260
    %v1267 = vld [vmem:[%s1] sm:$0xf]
    %v1268 = vld [vmem:[%s1 + $0x4] sm:$0xf]
    %v1269 = vld [vmem:[%s1 + $0x8] sm:$0xf]
    %v1270 = vld [vmem:[%s1 + $0xc] sm:$0xf]
    %v1271 = vld [vmem:[%s1 + $0x10] sm:$0xf]
    %v1272 = vld [vmem:[%s1 + $0x14] sm:$0xf]
    %v1273 = vld [vmem:[%s1 + $0x18] sm:$0xf]
    %v1274 = vld [vmem:[%s1 + $0x1c] sm:$0xf]
    %v1275 = vld [vmem:[%s1 + $0x20] sm:$0xf]
    %v1276 = vld [vmem:[%s1 + $0x24] sm:$0xf]
    %v1277 = vld [vmem:[%s1 + $0x28] sm:$0xf]
    %v1278 = vld [vmem:[%s1 + $0x2c] sm:$0xf]
    %v1279 = vld [vmem:[%s1 + $0x30] sm:$0xf]
    %v1280 = vld [vmem:[%s1 + $0x34] sm:$0xf]
    %v1281 = vld [vmem:[%s1 + $0x38] sm:$0xf]
    %v1282 = vld [vmem:[%s1 + $0x3c] sm:$0xf]
    %v1283 = vld [vmem:[%s1 + $0x40] sm:$0xf]
    %v1284 = vld [vmem:[%s1 + $0x44] sm:$0xf]
    %v1285 = vld [vmem:[%s1 + $0x48] sm:$0xf]
    %v1286 = vld [vmem:[%s1 + $0x4c] sm:$0xf]
    %v1287 = vld [vmem:[%s1 + $0x50] sm:$0xf]
    %v1288 = vld [vmem:[%s1 + $0x54] sm:$0xf]
    %v1289 = vld [vmem:[%s1 + $0x58] sm:$0xf]
    %v1290 = vld [vmem:[%s1 + $0x5c] sm:$0xf]
    %v1291 = vld [vmem:[%s1 + $0x60] sm:$0xf]
    %v1292 = vld [vmem:[%s1 + $0x64] sm:$0xf]
    %v1293 = vld [vmem:[%s1 + $0x68] sm:$0xf]
    %v1294 = vld [vmem:[%s1 + $0x6c] sm:$0xf]
    %v1295 = vstv %s1106
    %v1324 = vunpack.c.l.b16 %v1267
    %v1325 = vunpack.c.l.b16 %v1268
    %v1326 = vunpack.c.l.b16 %v1269
    %v1327 = vunpack.c.l.b16 %v1270
    %v1328 = vunpack.c.l.b16 %v1271
    %v1329 = vunpack.c.l.b16 %v1272
    %v1330 = vunpack.c.l.b16 %v1273
    %v1331 = vunpack.c.l.b16 %v1274
    %v1332 = vunpack.c.l.b16 %v1275
    %v1333 = vunpack.c.l.b16 %v1276
    %v1334 = vunpack.c.l.b16 %v1277
    %v1335 = vunpack.c.l.b16 %v1278
    %v1336 = vunpack.c.l.b16 %v1279
    %v1337 = vunpack.c.l.b16 %v1280
    %v1338 = vunpack.c.l.b16 %v1281
    %v1339 = vunpack.c.l.b16 %v1282
    %v1340 = vunpack.c.l.b16 %v1283
    %v1341 = vunpack.c.l.b16 %v1284
    %v1342 = vunpack.c.l.b16 %v1285
    %v1343 = vunpack.c.l.b16 %v1286
    %v1344 = vunpack.c.l.b16 %v1287
    %v1345 = vunpack.c.l.b16 %v1288
    %v1346 = vunpack.c.l.b16 %v1289
    %v1347 = vunpack.c.l.b16 %v1290
    %v1348 = vunpack.c.l.b16 %v1291
    %v1349 = vunpack.c.l.b16 %v1292
    %v1350 = vunpack.c.l.b16 %v1293
    %v1351 = vunpack.c.l.b16 %v1294
    %v1352 = vpack.c.b16 %v1325, %v1324
    %v1353 = vpack.c.b16 %v1327, %v1326
    %v1354 = vpack.c.b16 %v1329, %v1328
    %v1355 = vpack.c.b16 %v1331, %v1330
    %v1356 = vpack.c.b16 %v1333, %v1332
    %v1357 = vpack.c.b16 %v1335, %v1334
    %v1358 = vpack.c.b16 %v1337, %v1336
    %v1359 = vpack.c.b16 %v1339, %v1338
    %v1360 = vpack.c.b16 %v1341, %v1340
    %v1361 = vpack.c.b16 %v1343, %v1342
    %v1362 = vpack.c.b16 %v1345, %v1344
    %v1363 = vpack.c.b16 %v1347, %v1346
    %v1364 = vpack.c.b16 %v1349, %v1348
    %v1365 = vpack.c.b16 %v1351, %v1350
    %v1380 = vsel %vm1175, %v1266, 0
    %1382 = vmatprep.subr.bf16.mxu0 0
    %1383 = vmatpush1.bf16.msra.mxu0 %v1352
    %1384 = vmatprep.subr.bf16.mxu0 0
    %1385 = vmatpush1.bf16.msra.mxu0 %v1353
    %1386 = vmatprep.subr.bf16.mxu0 0
    %1387 = vmatpush1.bf16.msra.mxu0 %v1354
    %1388 = vmatprep.subr.bf16.mxu0 0
    %1389 = vmatpush1.bf16.msra.mxu0 %v1355
    %1390 = vmatprep.subr.bf16.mxu0 0
    %1391 = vmatpush1.bf16.msra.mxu0 %v1356
    %1392 = vmatprep.subr.bf16.mxu0 0
    %1393 = vmatpush1.bf16.msra.mxu0 %v1357
    %1394 = vmatprep.subr.bf16.mxu0 0
    %1395 = vmatpush1.bf16.msra.mxu0 %v1358
    %1396 = vmatprep.subr.bf16.mxu0 0
    %1397 = vmatpush1.bf16.msra.mxu0 %v1359
    %1398 = vmatprep.subr.bf16.mxu0 0
    %1399 = vmatpush1.bf16.msra.mxu0 %v1360
    %1400 = vmatprep.subr.bf16.mxu0 0
    %1401 = vmatpush1.bf16.msra.mxu0 %v1361
    %1402 = vmatprep.subr.bf16.mxu0 0
    %1403 = vmatpush1.bf16.msra.mxu0 %v1362
    %1404 = vmatprep.subr.bf16.mxu0 0
    %1405 = vmatpush1.bf16.msra.mxu0 %v1363
    %1406 = vmatprep.subr.bf16.mxu0 0
    %1407 = vmatpush1.bf16.msra.mxu0 %v1364
    %1408 = vmatprep.subr.bf16.mxu0 0
    %1409 = vmatpush1.bf16.msra.mxu0 %v1365
    %1410 = vmatprep.subr.bf16.mxu0 0
    %1411 = vmatpush1.bf16.msra.mxu0 0
    %1412 = vmatprep.subr.bf16.mxu0 0
    %1413 = vmatpush1.bf16.msra.mxu0 0
    %1414 = vmatprep.mubr.bf16.mxu0 %v1380
    %1415 = vmatmul.mubr.bf16.gmra.mrb[0].mxu0 %v1263
    %v1416 = vpop.f32.mrb[0].mxu0
    %v1417 = vadd.f32 %v1295, %v1416
    %v1418 = vpop.f32.mrb[0].mxu0
    %v1419 = vpop.f32.mrb[0].mxu0
    %v1420 = vpop.f32.mrb[0].mxu0
    %1421 = vdwg.mxu0
    %v1422 = vxor.u32 %v1417, 2147483648
    %v1423 = vmul.f32 %v1422, 1.442695
    %v1424 = vpow.pop %v1423
    %v1425 = vadd.f32 %v1424, 1.0
    %v1426 = vrcp.pop %v1425
    %v1427 = vmul.f32 1.0, %v1426
    %v1428 = vmul.f32 %v1417, %v1427
    %v1429 = vmul.f32 %v1428, 0.33333334
    %s1430 = sld [smem:[#allocation5 + $0x1]]
    %v1431 = vld [vmem:[#allocation3] sm:$0x3]
    %v1432 = vld [vmem:[#allocation3] sm:$0x7]
    %v1433 = vld [vmem:[#allocation3] sm:$0x6]
    %v1434 = vld [vmem:[#allocation3] sm:$0xe]
    %v1435 = vld [vmem:[#allocation3] sm:$0xc]
    %v1436 = vld [vmem:[#allocation3 + $0x4] sm:$0x1]
    %v1437 = vld [vmem:[#allocation3] sm:$0x8]
    %v1439 = vunpack.c.l.b16 %v1432
    %v1440 = vpack.c.b16 %v1439, %v1439
    %v1442 = vshrl.u32 %v1440, 16
    %v1444 = vshll.u32 %v1440, 16
    %v1446 = vrot.slane %v1444, 1
    %v1447 = vor.u32 %v1442, %v1446
    %1448 = vrot.lane.b32.xlu0 %v1447, 32
    %v1449 = vpop.permute.xlu0 %1448
    %v1451 = vunpack.c.l.b16 %v1433
    %v1452 = vpack.c.b16 %v1451, %v1451
    %v1453 = vrot.slane %v1452, 1
    %1454 = vrot.lane.b32.xlu0 %v1453, 64
    %v1455 = vpop.permute.xlu0 %1454
    %v1457 = vunpack.c.l.b16 %v1434
    %v1458 = vpack.c.b16 %v1457, %v1457
    %v1460 = vshrl.u32 %v1458, 16
    %v1462 = vrot.slane %v1460, 1
    %v1463 = vshll.u32 %v1458, 16
    %v1465 = vrot.slane %v1463, 2
    %v1466 = vor.u32 %v1462, %v1465
    %1467 = vrot.lane.b32.xlu0 %v1466, 96
    %v1468 = vpop.permute.xlu0 %1467
    %v1470 = vunpack.c.l.b16 %v1435
    %v1471 = vpack.c.b16 %v1470, %v1470
    %v1472 = vrot.slane %v1471, 2
    %v1474 = vunpack.c.l.b16 %v1436
    %v1475 = vpack.c.b16 %v1474, %v1470
    %v1477 = vshrl.u32 %v1475, 16
    %v1479 = vrot.slane %v1477, 2
    %v1480 = vshll.u32 %v1475, 16
    %v1482 = vrot.slane %v1480, 3
    %v1483 = vor.u32 %v1479, %v1482
    %1484 = vrot.lane.b32.xlu0 %v1483, 32
    %v1485 = vpop.permute.xlu0 %1484
    %v1487 = vunpack.c.l.b16 %v1437
    %v1488 = vpack.c.b16 %v1474, %v1487
    %v1489 = vrot.slane %v1488, 3
    %1490 = vrot.lane.b32.xlu0 %v1489, 64
    %v1491 = vpop.permute.xlu0 %1490
    %v1494 = vsel %vm1168, %v1431, %v1449
    %v1496 = vsel %vm1172, %v1494, %v1455
    %v1498 = vsel %vm1175, %v1496, %v1468
    %v1501 = vsel %vm1168, %v1472, %v1485
    %v1503 = vsel %vm1172, %v1501, %v1491
    %s1504 = scalar_lea.vmem [#allocation3], 8
    %v1505 = vld [vmem:[%s1504] sm:$0x3]
    %v1506 = vld [vmem:[%s1504] sm:$0x7]
    %v1507 = vld [vmem:[%s1504] sm:$0x6]
    %v1508 = vld [vmem:[%s1504] sm:$0xe]
    %v1509 = vld [vmem:[%s1504] sm:$0xc]
    %v1510 = vld [vmem:[%s1504 + $0x4] sm:$0x1]
    %v1511 = vld [vmem:[%s1504] sm:$0x8]
    %v1513 = vunpack.c.l.b16 %v1506
    %v1514 = vpack.c.b16 %v1513, %v1513
    %v1516 = vshrl.u32 %v1514, 16
    %v1518 = vshll.u32 %v1514, 16
    %v1520 = vrot.slane %v1518, 1
    %v1521 = vor.u32 %v1516, %v1520
    %1522 = vrot.lane.b32.xlu0 %v1521, 32
    %v1523 = vpop.permute.xlu0 %1522
    %v1525 = vunpack.c.l.b16 %v1507
    %v1526 = vpack.c.b16 %v1525, %v1525
    %v1527 = vrot.slane %v1526, 1
    %1528 = vrot.lane.b32.xlu0 %v1527, 64
    %v1529 = vpop.permute.xlu0 %1528
    %v1531 = vunpack.c.l.b16 %v1508
    %v1532 = vpack.c.b16 %v1531, %v1531
    %v1534 = vshrl.u32 %v1532, 16
    %v1536 = vrot.slane %v1534, 1
    %v1537 = vshll.u32 %v1532, 16
    %v1539 = vrot.slane %v1537, 2
    %v1540 = vor.u32 %v1536, %v1539
    %1541 = vrot.lane.b32.xlu0 %v1540, 96
    %v1542 = vpop.permute.xlu0 %1541
    %v1544 = vunpack.c.l.b16 %v1509
    %v1545 = vpack.c.b16 %v1544, %v1544
    %v1546 = vrot.slane %v1545, 2
    %v1548 = vunpack.c.l.b16 %v1510
    %v1549 = vpack.c.b16 %v1548, %v1544
    %v1551 = vshrl.u32 %v1549, 16
    %v1553 = vrot.slane %v1551, 2
    %v1554 = vshll.u32 %v1549, 16
    %v1556 = vrot.slane %v1554, 3
    %v1557 = vor.u32 %v1553, %v1556
    %1558 = vrot.lane.b32.xlu0 %v1557, 32
    %v1559 = vpop.permute.xlu0 %1558
    %v1561 = vunpack.c.l.b16 %v1511
    %v1562 = vpack.c.b16 %v1548, %v1561
    %v1563 = vrot.slane %v1562, 3
    %1564 = vrot.lane.b32.xlu0 %v1563, 64
    %v1565 = vpop.permute.xlu0 %1564
    %v1568 = vsel %vm1168, %v1505, %v1523
    %v1570 = vsel %vm1172, %v1568, %v1529
    %v1572 = vsel %vm1175, %v1570, %v1542
    %v1575 = vsel %vm1168, %v1546, %v1559
    %v1577 = vsel %vm1172, %v1575, %v1565
    %v1580 = vrot.slane %v1572, 6
    %v1581 = vrot.slane %v1577, 6
    %v1583 = vsel %vm1261, %v1498, %v1580
    %v1586 = vsel %vm1261, %v1503, %v1581
    %v1587 = vld [vmem:[%s2] sm:$0xf]
    %v1588 = vld [vmem:[%s2 + $0x4] sm:$0xf]
    %v1589 = vld [vmem:[%s2 + $0x8] sm:$0xf]
    %v1590 = vld [vmem:[%s2 + $0xc] sm:$0xf]
    %v1591 = vld [vmem:[%s2 + $0x10] sm:$0xf]
    %v1592 = vld [vmem:[%s2 + $0x14] sm:$0xf]
    %v1593 = vld [vmem:[%s2 + $0x18] sm:$0xf]
    %v1594 = vld [vmem:[%s2 + $0x1c] sm:$0xf]
    %v1595 = vld [vmem:[%s2 + $0x20] sm:$0xf]
    %v1596 = vld [vmem:[%s2 + $0x24] sm:$0xf]
    %v1597 = vld [vmem:[%s2 + $0x28] sm:$0xf]
    %v1598 = vld [vmem:[%s2 + $0x2c] sm:$0xf]
    %v1599 = vld [vmem:[%s2 + $0x30] sm:$0xf]
    %v1600 = vld [vmem:[%s2 + $0x34] sm:$0xf]
    %v1601 = vld [vmem:[%s2 + $0x38] sm:$0xf]
    %v1602 = vld [vmem:[%s2 + $0x3c] sm:$0xf]
    %v1603 = vld [vmem:[%s2 + $0x40] sm:$0xf]
    %v1604 = vld [vmem:[%s2 + $0x44] sm:$0xf]
    %v1605 = vld [vmem:[%s2 + $0x48] sm:$0xf]
    %v1606 = vld [vmem:[%s2 + $0x4c] sm:$0xf]
    %v1607 = vld [vmem:[%s2 + $0x50] sm:$0xf]
    %v1608 = vld [vmem:[%s2 + $0x54] sm:$0xf]
    %v1609 = vld [vmem:[%s2 + $0x58] sm:$0xf]
    %v1610 = vld [vmem:[%s2 + $0x5c] sm:$0xf]
    %v1611 = vld [vmem:[%s2 + $0x60] sm:$0xf]
    %v1612 = vld [vmem:[%s2 + $0x64] sm:$0xf]
    %v1613 = vld [vmem:[%s2 + $0x68] sm:$0xf]
    %v1614 = vld [vmem:[%s2 + $0x6c] sm:$0xf]
    %v1615 = vstv %s1430
    %v1644 = vunpack.c.l.b16 %v1587
    %v1645 = vunpack.c.l.b16 %v1588
    %v1646 = vunpack.c.l.b16 %v1589
    %v1647 = vunpack.c.l.b16 %v1590
    %v1648 = vunpack.c.l.b16 %v1591
    %v1649 = vunpack.c.l.b16 %v1592
    %v1650 = vunpack.c.l.b16 %v1593
    %v1651 = vunpack.c.l.b16 %v1594
    %v1652 = vunpack.c.l.b16 %v1595
    %v1653 = vunpack.c.l.b16 %v1596
    %v1654 = vunpack.c.l.b16 %v1597
    %v1655 = vunpack.c.l.b16 %v1598
    %v1656 = vunpack.c.l.b16 %v1599
    %v1657 = vunpack.c.l.b16 %v1600
    %v1658 = vunpack.c.l.b16 %v1601
    %v1659 = vunpack.c.l.b16 %v1602
    %v1660 = vunpack.c.l.b16 %v1603
    %v1661 = vunpack.c.l.b16 %v1604
    %v1662 = vunpack.c.l.b16 %v1605
    %v1663 = vunpack.c.l.b16 %v1606
    %v1664 = vunpack.c.l.b16 %v1607
    %v1665 = vunpack.c.l.b16 %v1608
    %v1666 = vunpack.c.l.b16 %v1609
    %v1667 = vunpack.c.l.b16 %v1610
    %v1668 = vunpack.c.l.b16 %v1611
    %v1669 = vunpack.c.l.b16 %v1612
    %v1670 = vunpack.c.l.b16 %v1613
    %v1671 = vunpack.c.l.b16 %v1614
    %v1672 = vpack.c.b16 %v1645, %v1644
    %v1673 = vpack.c.b16 %v1647, %v1646
    %v1674 = vpack.c.b16 %v1649, %v1648
    %v1675 = vpack.c.b16 %v1651, %v1650
    %v1676 = vpack.c.b16 %v1653, %v1652
    %v1677 = vpack.c.b16 %v1655, %v1654
    %v1678 = vpack.c.b16 %v1657, %v1656
    %v1679 = vpack.c.b16 %v1659, %v1658
    %v1680 = vpack.c.b16 %v1661, %v1660
    %v1681 = vpack.c.b16 %v1663, %v1662
    %v1682 = vpack.c.b16 %v1665, %v1664
    %v1683 = vpack.c.b16 %v1667, %v1666
    %v1684 = vpack.c.b16 %v1669, %v1668
    %v1685 = vpack.c.b16 %v1671, %v1670
    %v1700 = vsel %vm1175, %v1586, 0
    %1702 = vmatprep.subr.bf16.mxu0 0
    %1703 = vmatpush1.bf16.msra.mxu0 %v1672
    %1704 = vmatprep.subr.bf16.mxu0 0
    %1705 = vmatpush1.bf16.msra.mxu0 %v1673
    %1706 = vmatprep.subr.bf16.mxu0 0
    %1707 = vmatpush1.bf16.msra.mxu0 %v1674
    %1708 = vmatprep.subr.bf16.mxu0 0
    %1709 = vmatpush1.bf16.msra.mxu0 %v1675
    %1710 = vmatprep.subr.bf16.mxu0 0
    %1711 = vmatpush1.bf16.msra.mxu0 %v1676
    %1712 = vmatprep.subr.bf16.mxu0 0
    %1713 = vmatpush1.bf16.msra.mxu0 %v1677
    %1714 = vmatprep.subr.bf16.mxu0 0
    %1715 = vmatpush1.bf16.msra.mxu0 %v1678
    %1716 = vmatprep.subr.bf16.mxu0 0
    %1717 = vmatpush1.bf16.msra.mxu0 %v1679
    %1718 = vmatprep.subr.bf16.mxu0 0
    %1719 = vmatpush1.bf16.msra.mxu0 %v1680
    %1720 = vmatprep.subr.bf16.mxu0 0
    %1721 = vmatpush1.bf16.msra.mxu0 %v1681
    %1722 = vmatprep.subr.bf16.mxu0 0
    %1723 = vmatpush1.bf16.msra.mxu0 %v1682
    %1724 = vmatprep.subr.bf16.mxu0 0
    %1725 = vmatpush1.bf16.msra.mxu0 %v1683
    %1726 = vmatprep.subr.bf16.mxu0 0
    %1727 = vmatpush1.bf16.msra.mxu0 %v1684
    %1728 = vmatprep.subr.bf16.mxu0 0
    %1729 = vmatpush1.bf16.msra.mxu0 %v1685
    %1730 = vmatprep.subr.bf16.mxu0 0
    %1731 = vmatpush1.bf16.msra.mxu0 0
    %1732 = vmatprep.subr.bf16.mxu0 0
    %1733 = vmatpush1.bf16.msra.mxu0 0
    %1734 = vmatprep.mubr.bf16.mxu0 %v1700
    %1735 = vmatmul.mubr.bf16.gmra.mrb[0].mxu0 %v1583
    %v1736 = vpop.f32.mrb[0].mxu0
    %v1737 = vadd.f32 %v1615, %v1736
    %v1738 = vpop.f32.mrb[0].mxu0
    %v1739 = vpop.f32.mrb[0].mxu0
    %v1740 = vpop.f32.mrb[0].mxu0
    %1741 = vdwg.mxu0
    %v1742 = vxor.u32 %v1737, 2147483648
    %v1743 = vmul.f32 %v1742, 1.442695
    %v1744 = vpow.pop %v1743
    %v1745 = vadd.f32 %v1744, 1.0
    %v1746 = vrcp.pop %v1745
    %v1747 = vmul.f32 1.0, %v1746
    %v1748 = vmul.f32 %v1737, %v1747
    %v1749 = vmul.f32 %v1748, 0.33333334
    %s1750 = sld [smem:[#allocation5 + $0x2]]
    %v1751 = vld [vmem:[#allocation4] sm:$0xf]
    %v1752 = vld [vmem:[#allocation4 + $0x4] sm:$0xf]
    %v1753 = vld [vmem:[#allocation4 + $0x8] sm:$0x1]
    %v1754 = vld [vmem:[#allocation4] sm:$0xe]
    %v1755 = vld [vmem:[#allocation4 + $0x8] sm:$0x3]
    %v1756 = vld [vmem:[#allocation4] sm:$0xc]
    %v1757 = vld [vmem:[#allocation4 + $0x8] sm:$0x7]
    %v1758 = vld [vmem:[#allocation4] sm:$0x8]
    %v1761 = vunpack.c.l.b16 %v1751
    %v1762 = vunpack.c.l.b16 %v1752
    %v1763 = vpack.c.b16 %v1762, %v1761
    %v1765 = vunpack.c.l.b16 %v1753
    %v1766 = vpack.c.b16 %v1765, %v1765
    %vm1767 = vsmask.f32 7424
    %v1769 = vshrl.u32 %v1763, 16
    %v1771 = vshll.u32 %v1763, 16
    %v1773 = vrot.slane %v1771, 1
    %v1774 = vor.u32 %v1769, %v1773
    %v1776 = vshll.u32 %v1766, 16
    %v1778 = vrot.slane %v1776, 1
    %v1779 = vsel %vm1767, %v1774, %v1778
    %1780 = vrot.lane.b32.xlu0 %v1779, 32
    %v1781 = vpop.permute.xlu0 %1780
    %v1783 = vunpack.c.l.b16 %v1754
    %v1784 = vpack.c.b16 %v1762, %v1783
    %vm1785 = vcmask 1046528
    %v1786 = vrot.slane %v1784, 1
    %v1787 = vrot.slane %v1766, 1
    %v1788 = vsel %vm1785, %v1786, %v1787
    %1789 = vrot.lane.b32.xlu0 %v1788, 64
    %v1790 = vpop.permute.xlu0 %1789
    %v1792 = vunpack.c.l.b16 %v1755
    %v1793 = vpack.c.b16 %v1792, %v1792
    %vm1794 = vsmask.f32 6400
    %v1796 = vshrl.u32 %v1784, 16
    %v1798 = vrot.slane %v1796, 1
    %v1799 = vshll.u32 %v1784, 16
    %v1801 = vrot.slane %v1799, 2
    %v1802 = vor.u32 %v1798, %v1801
    %v1804 = vshrl.u32 %v1793, 16
    %v1806 = vrot.slane %v1804, 1
    %v1807 = vshll.u32 %v1793, 16
    %v1809 = vrot.slane %v1807, 2
    %v1810 = vor.u32 %v1806, %v1809
    %v1811 = vsel %vm1794, %v1802, %v1810
    %1812 = vrot.lane.b32.xlu0 %v1811, 96
    %v1813 = vpop.permute.xlu0 %1812
    %v1815 = vunpack.c.l.b16 %v1756
    %v1816 = vpack.c.b16 %v1762, %v1815
    %vm1817 = vcmask 1045504
    %v1818 = vrot.slane %v1816, 2
    %v1819 = vrot.slane %v1793, 2
    %v1820 = vsel %vm1817, %v1818, %v1819
    %v1822 = vunpack.c.l.b16 %v1757
    %v1823 = vpack.c.b16 %v1822, %v1822
    %vm1824 = vsmask.f32 5376
    %v1826 = vshrl.u32 %v1816, 16
    %v1828 = vrot.slane %v1826, 2
    %v1829 = vshll.u32 %v1816, 16
    %v1831 = vrot.slane %v1829, 3
    %v1832 = vor.u32 %v1828, %v1831
    %v1834 = vshrl.u32 %v1823, 16
    %v1836 = vrot.slane %v1834, 2
    %v1837 = vshll.u32 %v1823, 16
    %v1839 = vrot.slane %v1837, 3
    %v1840 = vor.u32 %v1836, %v1839
    %v1841 = vsel %vm1824, %v1832, %v1840
    %1842 = vrot.lane.b32.xlu0 %v1841, 32
    %v1843 = vpop.permute.xlu0 %1842
    %v1845 = vunpack.c.l.b16 %v1758
    %v1846 = vpack.c.b16 %v1762, %v1845
    %vm1847 = vcmask 1044480
    %v1848 = vrot.slane %v1846, 3
    %v1849 = vrot.slane %v1823, 3
    %v1850 = vsel %vm1847, %v1848, %v1849
    %1851 = vrot.lane.b32.xlu0 %v1850, 64
    %v1852 = vpop.permute.xlu0 %1851
    %v1854 = vsel %vm1168, %v1763, %v1781
    %v1856 = vsel %vm1172, %v1854, %v1790
    %v1858 = vsel %vm1175, %v1856, %v1813
    %v1862 = vsel %vm1168, %v1820, %v1843
    %v1864 = vsel %vm1172, %v1862, %v1852
    %s1865 = scalar_lea.vmem [#allocation4], 12
    %v1866 = vld [vmem:[%s1865] sm:$0xf]
    %v1867 = vld [vmem:[%s1865 + $0x4] sm:$0xf]
    %v1868 = vld [vmem:[%s1865 + $0x8] sm:$0x1]
    %v1869 = vld [vmem:[%s1865] sm:$0xe]
    %v1870 = vld [vmem:[%s1865 + $0x8] sm:$0x3]
    %v1871 = vld [vmem:[%s1865] sm:$0xc]
    %v1872 = vld [vmem:[%s1865 + $0x8] sm:$0x7]
    %v1873 = vld [vmem:[%s1865] sm:$0x8]
    %v1876 = vunpack.c.l.b16 %v1866
    %v1877 = vunpack.c.l.b16 %v1867
    %v1878 = vpack.c.b16 %v1877, %v1876
    %v1880 = vunpack.c.l.b16 %v1868
    %v1881 = vpack.c.b16 %v1880, %v1880
    %v1883 = vshrl.u32 %v1878, 16
    %v1885 = vshll.u32 %v1878, 16
    %v1887 = vrot.slane %v1885, 1
    %v1888 = vor.u32 %v1883, %v1887
    %v1890 = vshll.u32 %v1881, 16
    %v1892 = vrot.slane %v1890, 1
    %v1893 = vsel %vm1767, %v1888, %v1892
    %1894 = vrot.lane.b32.xlu0 %v1893, 32
    %v1895 = vpop.permute.xlu0 %1894
    %v1897 = vunpack.c.l.b16 %v1869
    %v1898 = vpack.c.b16 %v1877, %v1897
    %v1899 = vrot.slane %v1898, 1
    %v1900 = vrot.slane %v1881, 1
    %v1901 = vsel %vm1785, %v1899, %v1900
    %1902 = vrot.lane.b32.xlu0 %v1901, 64
    %v1903 = vpop.permute.xlu0 %1902
    %v1905 = vunpack.c.l.b16 %v1870
    %v1906 = vpack.c.b16 %v1905, %v1905
    %v1908 = vshrl.u32 %v1898, 16
    %v1910 = vrot.slane %v1908, 1
    %v1911 = vshll.u32 %v1898, 16
    %v1913 = vrot.slane %v1911, 2
    %v1914 = vor.u32 %v1910, %v1913
    %v1916 = vshrl.u32 %v1906, 16
    %v1918 = vrot.slane %v1916, 1
    %v1919 = vshll.u32 %v1906, 16
    %v1921 = vrot.slane %v1919, 2
    %v1922 = vor.u32 %v1918, %v1921
    %v1923 = vsel %vm1794, %v1914, %v1922
    %1924 = vrot.lane.b32.xlu0 %v1923, 96
    %v1925 = vpop.permute.xlu0 %1924
    %v1927 = vunpack.c.l.b16 %v1871
    %v1928 = vpack.c.b16 %v1877, %v1927
    %v1929 = vrot.slane %v1928, 2
    %v1930 = vrot.slane %v1906, 2
    %v1931 = vsel %vm1817, %v1929, %v1930
    %v1933 = vunpack.c.l.b16 %v1872
    %v1934 = vpack.c.b16 %v1933, %v1933
    %v1936 = vshrl.u32 %v1928, 16
    %v1938 = vrot.slane %v1936, 2
    %v1939 = vshll.u32 %v1928, 16
    %v1941 = vrot.slane %v1939, 3
    %v1942 = vor.u32 %v1938, %v1941
    %v1944 = vshrl.u32 %v1934, 16
    %v1946 = vrot.slane %v1944, 2
    %v1947 = vshll.u32 %v1934, 16
    %v1949 = vrot.slane %v1947, 3
    %v1950 = vor.u32 %v1946, %v1949
    %v1951 = vsel %vm1824, %v1942, %v1950
    %1952 = vrot.lane.b32.xlu0 %v1951, 32
    %v1953 = vpop.permute.xlu0 %1952
    %v1955 = vunpack.c.l.b16 %v1873
    %v1956 = vpack.c.b16 %v1877, %v1955
    %v1957 = vrot.slane %v1956, 3
    %v1958 = vrot.slane %v1934, 3
    %v1959 = vsel %vm1847, %v1957, %v1958
    %1960 = vrot.lane.b32.xlu0 %v1959, 64
    %v1961 = vpop.permute.xlu0 %1960
    %v1963 = vsel %vm1168, %v1878, %v1895
    %v1965 = vsel %vm1172, %v1963, %v1903
    %v1967 = vsel %vm1175, %v1965, %v1925
    %v1971 = vsel %vm1168, %v1931, %v1953
    %v1973 = vsel %vm1172, %v1971, %v1961
    %v1974 = vld [vmem:[%s3] sm:$0xf]
    %v1975 = vld [vmem:[%s3 + $0x4] sm:$0xf]
    %v1976 = vld [vmem:[%s3 + $0x8] sm:$0xf]
    %v1977 = vld [vmem:[%s3 + $0xc] sm:$0xf]
    %v1978 = vld [vmem:[%s3 + $0x10] sm:$0xf]
    %v1979 = vld [vmem:[%s3 + $0x14] sm:$0xf]
    %v1980 = vld [vmem:[%s3 + $0x18] sm:$0xf]
    %v1981 = vld [vmem:[%s3 + $0x1c] sm:$0xf]
    %v1982 = vld [vmem:[%s3 + $0x20] sm:$0xf]
    %v1983 = vld [vmem:[%s3 + $0x24] sm:$0xf]
    %v1984 = vld [vmem:[%s3 + $0x28] sm:$0xf]
    %v1985 = vld [vmem:[%s3 + $0x2c] sm:$0xf]
    %v1986 = vld [vmem:[%s3 + $0x30] sm:$0xf]
    %v1987 = vld [vmem:[%s3 + $0x34] sm:$0xf]
    %v1988 = vld [vmem:[%s3 + $0x38] sm:$0xf]
    %v1989 = vld [vmem:[%s3 + $0x3c] sm:$0xf]
    %v1990 = vld [vmem:[%s3 + $0x40] sm:$0xf]
    %v1991 = vld [vmem:[%s3 + $0x44] sm:$0xf]
    %v1992 = vld [vmem:[%s3 + $0x48] sm:$0xf]
    %v1993 = vld [vmem:[%s3 + $0x4c] sm:$0xf]
    %v1994 = vld [vmem:[%s3 + $0x50] sm:$0xf]
    %v1995 = vld [vmem:[%s3 + $0x54] sm:$0xf]
    %v1996 = vld [vmem:[%s3 + $0x58] sm:$0xf]
    %v1997 = vld [vmem:[%s3 + $0x5c] sm:$0xf]
    %v1998 = vld [vmem:[%s3 + $0x60] sm:$0xf]
    %v1999 = vld [vmem:[%s3 + $0x64] sm:$0xf]
    %v2000 = vld [vmem:[%s3 + $0x68] sm:$0xf]
    %v2001 = vld [vmem:[%s3 + $0x6c] sm:$0xf]
    %v2002 = vstv %s1750
    %v2031 = vunpack.c.l.b16 %v1974
    %v2032 = vunpack.c.l.b16 %v1975
    %v2033 = vunpack.c.l.b16 %v1976
    %v2034 = vunpack.c.l.b16 %v1977
    %v2035 = vunpack.c.l.b16 %v1978
    %v2036 = vunpack.c.l.b16 %v1979
    %v2037 = vunpack.c.l.b16 %v1980
    %v2038 = vunpack.c.l.b16 %v1981
    %v2039 = vunpack.c.l.b16 %v1982
    %v2040 = vunpack.c.l.b16 %v1983
    %v2041 = vunpack.c.l.b16 %v1984
    %v2042 = vunpack.c.l.b16 %v1985
    %v2043 = vunpack.c.l.b16 %v1986
    %v2044 = vunpack.c.l.b16 %v1987
    %v2045 = vunpack.c.l.b16 %v1988
    %v2046 = vunpack.c.l.b16 %v1989
    %v2047 = vunpack.c.l.b16 %v1990
    %v2048 = vunpack.c.l.b16 %v1991
    %v2049 = vunpack.c.l.b16 %v1992
    %v2050 = vunpack.c.l.b16 %v1993
    %v2051 = vunpack.c.l.b16 %v1994
    %v2052 = vunpack.c.l.b16 %v1995
    %v2053 = vunpack.c.l.b16 %v1996
    %v2054 = vunpack.c.l.b16 %v1997
    %v2055 = vunpack.c.l.b16 %v1998
    %v2056 = vunpack.c.l.b16 %v1999
    %v2057 = vunpack.c.l.b16 %v2000
    %v2058 = vunpack.c.l.b16 %v2001
    %v2059 = vpack.c.b16 %v2032, %v2031
    %v2060 = vpack.c.b16 %v2034, %v2033
    %v2061 = vpack.c.b16 %v2036, %v2035
    %v2062 = vpack.c.b16 %v2038, %v2037
    %v2063 = vpack.c.b16 %v2040, %v2039
    %v2064 = vpack.c.b16 %v2042, %v2041
    %v2065 = vpack.c.b16 %v2044, %v2043
    %v2066 = vpack.c.b16 %v2046, %v2045
    %v2067 = vpack.c.b16 %v2048, %v2047
    %v2068 = vpack.c.b16 %v2050, %v2049
    %v2069 = vpack.c.b16 %v2052, %v2051
    %v2070 = vpack.c.b16 %v2054, %v2053
    %v2071 = vpack.c.b16 %v2056, %v2055
    %v2072 = vpack.c.b16 %v2058, %v2057
    %v2087 = vsel %vm1175, %v1864, 0
    %v2089 = vsel %vm1175, %v1973, 0
    %2091 = vmatprep.subr.bf16.mxu0 0
    %2092 = vmatpush1.bf16.msra.mxu0 %v2059
    %2093 = vmatprep.subr.bf16.mxu0 0
    %2094 = vmatpush1.bf16.msra.mxu0 %v2060
    %2095 = vmatprep.subr.bf16.mxu0 0
    %2096 = vmatpush1.bf16.msra.mxu0 %v2061
    %2097 = vmatprep.subr.bf16.mxu0 0
    %2098 = vmatpush1.bf16.msra.mxu0 %v2062
    %2099 = vmatprep.subr.bf16.mxu0 0
    %2100 = vmatpush1.bf16.msra.mxu0 %v2063
    %2101 = vmatprep.subr.bf16.mxu0 0
    %2102 = vmatpush1.bf16.msra.mxu0 %v2064
    %2103 = vmatprep.subr.bf16.mxu0 0
    %2104 = vmatpush1.bf16.msra.mxu0 %v2065
    %2105 = vmatprep.subr.bf16.mxu0 0
    %2106 = vmatpush1.bf16.msra.mxu0 %v2066
    %2107 = vmatprep.subr.bf16.mxu0 0
    %2108 = vmatpush1.bf16.msra.mxu0 %v2067
    %2109 = vmatprep.subr.bf16.mxu0 0
    %2110 = vmatpush1.bf16.msra.mxu0 %v2068
    %2111 = vmatprep.subr.bf16.mxu0 0
    %2112 = vmatpush1.bf16.msra.mxu0 %v2069
    %2113 = vmatprep.subr.bf16.mxu0 0
    %2114 = vmatpush1.bf16.msra.mxu0 %v2070
    %2115 = vmatprep.subr.bf16.mxu0 0
    %2116 = vmatpush1.bf16.msra.mxu0 %v2071
    %2117 = vmatprep.subr.bf16.mxu0 0
    %2118 = vmatpush1.bf16.msra.mxu0 %v2072
    %2119 = vmatprep.subr.bf16.mxu0 0
    %2120 = vmatpush1.bf16.msra.mxu0 0
    %2121 = vmatprep.subr.bf16.mxu0 0
    %2122 = vmatpush1.bf16.msra.mxu0 0
    %2123 = vmatprep.mubr.bf16.mxu0 %v2087
    %2124 = vmatmul.mubr.bf16.gmra.mrb[0].mxu0 %v1858
    %v2125 = vpop.f32.mrb[0].mxu0
    %v2126 = vadd.f32 %v2002, %v2125
    %v2127 = vpop.f32.mrb[0].mxu0
    %v2128 = vpop.f32.mrb[0].mxu0
    %v2129 = vadd.f32 %v2002, %v2128
    %v2130 = vpop.f32.mrb[0].mxu0
    %2131 = vmatprep.mubr.bf16.mxu0 %v2089
    %2132 = vmatmul.mubr.bf16.gmra.mrb[0].mxu0 %v1967
    %v2133 = vpop.f32.mrb[0].mxu0
    %v2134 = vadd.f32 %v2002, %v2133
    %v2135 = vpop.f32.mrb[0].mxu0
    %v2136 = vpop.f32.mrb[0].mxu0
    %v2137 = vadd.f32 %v2002, %v2136
    %v2138 = vpop.f32.mrb[0].mxu0
    %2139 = vdwg.mxu0
    %v2140 = vxor.u32 %v2126, 2147483648
    %v2141 = vxor.u32 %v2129, 2147483648
    %v2142 = vxor.u32 %v2134, 2147483648
    %v2143 = vxor.u32 %v2137, 2147483648
    %v2144 = vmul.f32 %v2140, 1.442695
    %v2145 = vpow.pop %v2144
    %v2146 = vmul.f32 %v2141, 1.442695
    %v2147 = vpow.pop %v2146
    %v2148 = vmul.f32 %v2142, 1.442695
    %v2149 = vpow.pop %v2148
    %v2150 = vmul.f32 %v2143, 1.442695
    %v2151 = vpow.pop %v2150
    %v2152 = vadd.f32 %v2145, 1.0
    %v2153 = vadd.f32 %v2147, 1.0
    %v2154 = vadd.f32 %v2149, 1.0
    %v2155 = vadd.f32 %v2151, 1.0
    %v2156 = vrcp.pop %v2152
    %v2157 = vmul.f32 1.0, %v2156
    %v2158 = vrcp.pop %v2153
    %v2159 = vmul.f32 1.0, %v2158
    %v2160 = vrcp.pop %v2154
    %v2161 = vmul.f32 1.0, %v2160
    %v2162 = vrcp.pop %v2155
    %v2163 = vmul.f32 1.0, %v2162
    %v2164 = vmul.f32 %v2126, %v2157
    %v2165 = vmul.f32 %v2129, %v2159
    %v2166 = vmul.f32 %v2134, %v2161
    %v2167 = vmul.f32 %v2137, %v2163
    %v2168 = vmul.f32 %v2164, 0.33333334
    %v2169 = vmul.f32 %v2165, 0.33333334
    %v2170 = vmul.f32 %v2166, 0.33333334
    %v2171 = vmul.f32 %v2167, 0.33333334
    %v2172 = vld [vmem:[%s4] sm:$0xff]
    %v2173 = vld [vmem:[%s4 + $0x8] sm:$0xff]
    %v2174 = vpack.c.bf16 %v1429, %v1429
    %v2175 = vpack.c.bf16 %v1749, %v1749
    %v2176 = vld [vmem:[%s5] sm:$0xff]
    %v2177 = vld [vmem:[%s5 + $0x8] sm:$0xff]
    %v2180 = vunpack.c.l.b16 %v2176
    %v2181 = vunpack.c.h.b16 %v2176
    %v2182 = vunpack.c.l.b16 %v2177
    %v2183 = vunpack.c.h.b16 %v2177
    %v2184 = vpack.c.b16 %v2182, %v2180
    %v2185 = vpack.c.b16 %v2183, %v2181
    %v2189 = vsel %vm114, %v2175, 0
    %2191 = vmatprep.subr.bf16.mxu0 %v2185
    %2192 = vmatpush1.bf16.msra.mxu0 %v2184
    %2193 = vmatprep.subr.bf16.mxu0 0
    %2194 = vmatpush1.bf16.msra.mxu0 0
    %2195 = vmatprep.subr.bf16.mxu0 0
    %2196 = vmatpush1.bf16.msra.mxu0 0
    %2197 = vmatprep.subr.bf16.mxu0 0
    %2198 = vmatpush1.bf16.msra.mxu0 0
    %2199 = vmatprep.subr.bf16.mxu0 0
    %2200 = vmatpush1.bf16.msra.mxu0 0
    %2201 = vmatprep.subr.bf16.mxu0 0
    %2202 = vmatpush1.bf16.msra.mxu0 0
    %2203 = vmatprep.subr.bf16.mxu0 0
    %2204 = vmatpush1.bf16.msra.mxu0 0
    %2205 = vmatprep.subr.bf16.mxu0 0
    %2206 = vmatpush1.bf16.msra.mxu0 0
    %2207 = vmatprep.subr.bf16.mxu0 0
    %2208 = vmatpush1.bf16.msra.mxu0 0
    %2209 = vmatprep.subr.bf16.mxu0 0
    %2210 = vmatpush1.bf16.msra.mxu0 0
    %2211 = vmatprep.subr.bf16.mxu0 0
    %2212 = vmatpush1.bf16.msra.mxu0 0
    %2213 = vmatprep.subr.bf16.mxu0 0
    %2214 = vmatpush1.bf16.msra.mxu0 0
    %2215 = vmatprep.subr.bf16.mxu0 0
    %2216 = vmatpush1.bf16.msra.mxu0 0
    %2217 = vmatprep.subr.bf16.mxu0 0
    %2218 = vmatpush1.bf16.msra.mxu0 0
    %2219 = vmatprep.subr.bf16.mxu0 0
    %2220 = vmatpush1.bf16.msra.mxu0 0
    %2221 = vmatprep.subr.bf16.mxu0 0
    %2222 = vmatpush1.bf16.msra.mxu0 0
    %2223 = vmatprep.mubr.bf16.mxu0 0
    %2224 = vmatmul.mubr.bf16.gmra.mrb[0].mxu0 %v2189
    %v2225 = vpop.f32.mrb[0].mxu0
    %v2226 = vadd.f32 0.0, %v2225
    %v2227 = vpop.f32.mrb[0].mxu0
    %v2228 = vadd.f32 0.0, %v2227
    %v2229 = vpop.f32.mrb[0].mxu0
    %v2230 = vpop.f32.mrb[0].mxu0
    %2231 = vdwg.mxu0
    %v2232 = vpack.c.bf16 %v2169, %v2168
    %v2233 = vpack.c.bf16 %v2171, %v2170
    %v2236 = vunpack.c.l.b16 %v2172
    %v2237 = vunpack.c.h.b16 %v2172
    %v2238 = vunpack.c.l.b16 %v2173
    %v2239 = vunpack.c.h.b16 %v2173
    %v2240 = vpack.c.b16 %v2238, %v2236
    %v2241 = vpack.c.b16 %v2239, %v2237
    %v2245 = vsel %vm114, %v2232, 0
    %v2248 = vsel %vm114, %v2233, 0
    %2250 = vmatprep.subr.bf16.mxu0 %v2241
    %2251 = vmatpush1.bf16.msra.mxu0 %v2240
    %2252 = vmatprep.subr.bf16.mxu0 0
    %2253 = vmatpush1.bf16.msra.mxu0 0
    %2254 = vmatprep.subr.bf16.mxu0 0
    %2255 = vmatpush1.bf16.msra.mxu0 0
    %2256 = vmatprep.subr.bf16.mxu0 0
    %2257 = vmatpush1.bf16.msra.mxu0 0
    %2258 = vmatprep.subr.bf16.mxu0 0
    %2259 = vmatpush1.bf16.msra.mxu0 0
    %2260 = vmatprep.subr.bf16.mxu0 0
    %2261 = vmatpush1.bf16.msra.mxu0 0
    %2262 = vmatprep.subr.bf16.mxu0 0
    %2263 = vmatpush1.bf16.msra.mxu0 0
    %2264 = vmatprep.subr.bf16.mxu0 0
    %2265 = vmatpush1.bf16.msra.mxu0 0
    %2266 = vmatprep.subr.bf16.mxu0 0
    %2267 = vmatpush1.bf16.msra.mxu0 0
    %2268 = vmatprep.subr.bf16.mxu0 0
    %2269 = vmatpush1.bf16.msra.mxu0 0
    %2270 = vmatprep.subr.bf16.mxu0 0
    %2271 = vmatpush1.bf16.msra.mxu0 0
    %2272 = vmatprep.subr.bf16.mxu0 0
    %2273 = vmatpush1.bf16.msra.mxu0 0
    %2274 = vmatprep.subr.bf16.mxu0 0
    %2275 = vmatpush1.bf16.msra.mxu0 0
    %2276 = vmatprep.subr.bf16.mxu0 0
    %2277 = vmatpush1.bf16.msra.mxu0 0
    %2278 = vmatprep.subr.bf16.mxu0 0
    %2279 = vmatpush1.bf16.msra.mxu0 0
    %2280 = vmatprep.subr.bf16.mxu0 0
    %2281 = vmatpush1.bf16.msra.mxu0 0
    %2282 = vmatprep.mubr.bf16.mxu0 0
    %2283 = vmatmul.mubr.bf16.gmra.mrb[0].mxu0 %v2245
    %v2284 = vpop.f32.mrb[0].mxu0
    %v2285 = vadd.f32 0.0, %v2284
    %v2286 = vpop.f32.mrb[0].mxu0
    %v2287 = vadd.f32 0.0, %v2286
    %v2288 = vpop.f32.mrb[0].mxu0
    %v2289 = vadd.f32 0.0, %v2288
    %v2290 = vpop.f32.mrb[0].mxu0
    %v2291 = vadd.f32 0.0, %v2290
    %2292 = vmatprep.mubr.bf16.mxu0 0
    %2293 = vmatmul.mubr.bf16.gmra.mrb[0].mxu0 %v2248
    %v2294 = vpop.f32.mrb[0].mxu0
    %v2295 = vadd.f32 0.0, %v2294
    %v2296 = vpop.f32.mrb[0].mxu0
    %v2297 = vadd.f32 0.0, %v2296
    %v2298 = vpop.f32.mrb[0].mxu0
    %v2299 = vadd.f32 0.0, %v2298
    %v2300 = vpop.f32.mrb[0].mxu0
    %v2301 = vadd.f32 0.0, %v2300
    %2302 = vdwg.mxu0
    %v2303 = vld [vmem:[%s5] sm:$0xff]
    %v2304 = vld [vmem:[%s5 + $0x8] sm:$0xff]
    %v2305 = vld [vmem:[%s5 + $0x10] sm:$0xff]
    %v2306 = vld [vmem:[%s5 + $0x18] sm:$0xff]
    %v2307 = vpack.c.bf16 %v2289, %v2285
    %v2308 = vpack.c.bf16 %v2291, %v2287
    %v2309 = vpack.c.bf16 %v2299, %v2295
    %v2310 = vpack.c.bf16 %v2301, %v2297
    %v2315 = vunpack.c.l.b16 %v2307
    %v2316 = vunpack.c.l.b16 %v2308
    %v2317 = vunpack.c.h.b16 %v2307
    %v2318 = vunpack.c.h.b16 %v2308
    %v2319 = vunpack.c.l.b16 %v2309
    %v2320 = vunpack.c.l.b16 %v2310
    %v2321 = vunpack.c.h.b16 %v2309
    %v2322 = vunpack.c.h.b16 %v2310
    %v2323 = vpack.c.b16 %v2316, %v2315
    %v2324 = vpack.c.b16 %v2318, %v2317
    %v2325 = vpack.c.b16 %v2320, %v2319
    %v2326 = vpack.c.b16 %v2322, %v2321
    %v2331 = vmul.bf16 %v2303, %v2323
    %v2332 = vmul.bf16 %v2304, %v2324
    %v2333 = vmul.bf16 %v2305, %v2325
    %v2334 = vmul.bf16 %v2306, %v2326
    %v2335 = vld [vmem:[%s6] sm:$0xf]
    %v2340 = vunpack.c.l.b16 %v2331
    %v2341 = vunpack.c.h.b16 %v2331
    %v2342 = vunpack.c.l.b16 %v2332
    %v2343 = vunpack.c.h.b16 %v2332
    %v2344 = vunpack.c.l.b16 %v2333
    %v2345 = vunpack.c.h.b16 %v2333
    %v2346 = vunpack.c.l.b16 %v2334
    %v2347 = vunpack.c.h.b16 %v2334
    %v2348 = vpack.c.b16 %v2342, %v2340
    %v2349 = vpack.c.b16 %v2343, %v2341
    %v2350 = vpack.c.b16 %v2346, %v2344
    %v2351 = vpack.c.b16 %v2347, %v2345
    %v2357 = vsel %vm1168, %v2335, 0
    %2359 = vmatprep.subr.bf16.mxu0 %v2349
    %2360 = vmatpush1.bf16.msra.mxu0 %v2348
    %2361 = vmatprep.subr.bf16.mxu0 %v2351
    %2362 = vmatpush1.bf16.msra.mxu0 %v2350
    %2363 = vmatprep.subr.bf16.mxu0 0
    %2364 = vmatpush1.bf16.msra.mxu0 0
    %2365 = vmatprep.subr.bf16.mxu0 0
    %2366 = vmatpush1.bf16.msra.mxu0 0
    %2367 = vmatprep.subr.bf16.mxu0 0
    %2368 = vmatpush1.bf16.msra.mxu0 0
    %2369 = vmatprep.subr.bf16.mxu0 0
    %2370 = vmatpush1.bf16.msra.mxu0 0
    %2371 = vmatprep.subr.bf16.mxu0 0
    %2372 = vmatpush1.bf16.msra.mxu0 0
    %2373 = vmatprep.subr.bf16.mxu0 0
    %2374 = vmatpush1.bf16.msra.mxu0 0
    %2375 = vmatprep.subr.bf16.mxu0 0
    %2376 = vmatpush1.bf16.msra.mxu0 0
    %2377 = vmatprep.subr.bf16.mxu0 0
    %2378 = vmatpush1.bf16.msra.mxu0 0
    %2379 = vmatprep.subr.bf16.mxu0 0
    %2380 = vmatpush1.bf16.msra.mxu0 0
    %2381 = vmatprep.subr.bf16.mxu0 0
    %2382 = vmatpush1.bf16.msra.mxu0 0
    %2383 = vmatprep.subr.bf16.mxu0 0
    %2384 = vmatpush1.bf16.msra.mxu0 0
    %2385 = vmatprep.subr.bf16.mxu0 0
    %2386 = vmatpush1.bf16.msra.mxu0 0
    %2387 = vmatprep.subr.bf16.mxu0 0
    %2388 = vmatpush1.bf16.msra.mxu0 0
    %2389 = vmatprep.subr.bf16.mxu0 0
    %2390 = vmatpush1.bf16.msra.mxu0 0
    %2391 = vmatprep.mubr.bf16.mxu0 0
    %2392 = vmatmul.mubr.bf16.gmra.mrb[0].mxu0 %v2357
    %v2393 = vpop.f32.mrb[0].mxu0
    %v2394 = vadd.f32 0.0, %v2393
    %v2395 = vpop.f32.mrb[0].mxu0
    %v2396 = vadd.f32 0.0, %v2395
    %v2397 = vpop.f32.mrb[0].mxu0
    %v2398 = vpop.f32.mrb[0].mxu0
    %2399 = vdwg.mxu0
    %v2401 = vsel %vm114, %v2174, 0
    %2403 = vmatprep.subr.bf16.mxu0 %v2241
    %2404 = vmatpush1.bf16.msra.mxu0 %v2240
    %2405 = vmatprep.subr.bf16.mxu0 0
    %2406 = vmatpush1.bf16.msra.mxu0 0
    %2407 = vmatprep.subr.bf16.mxu0 0
    %2408 = vmatpush1.bf16.msra.mxu0 0
    %2409 = vmatprep.subr.bf16.mxu0 0
    %2410 = vmatpush1.bf16.msra.mxu0 0
    %2411 = vmatprep.subr.bf16.mxu0 0
    %2412 = vmatpush1.bf16.msra.mxu0 0
    %2413 = vmatprep.subr.bf16.mxu0 0
    %2414 = vmatpush1.bf16.msra.mxu0 0
    %2415 = vmatprep.subr.bf16.mxu0 0
    %2416 = vmatpush1.bf16.msra.mxu0 0
    %2417 = vmatprep.subr.bf16.mxu0 0
    %2418 = vmatpush1.bf16.msra.mxu0 0
    %2419 = vmatprep.subr.bf16.mxu0 0
    %2420 = vmatpush1.bf16.msra.mxu0 0
    %2421 = vmatprep.subr.bf16.mxu0 0
    %2422 = vmatpush1.bf16.msra.mxu0 0
    %2423 = vmatprep.subr.bf16.mxu0 0
    %2424 = vmatpush1.bf16.msra.mxu0 0
    %2425 = vmatprep.subr.bf16.mxu0 0
    %2426 = vmatpush1.bf16.msra.mxu0 0
    %2427 = vmatprep.subr.bf16.mxu0 0
    %2428 = vmatpush1.bf16.msra.mxu0 0
    %2429 = vmatprep.subr.bf16.mxu0 0
    %2430 = vmatpush1.bf16.msra.mxu0 0
    %2431 = vmatprep.subr.bf16.mxu0 0
    %2432 = vmatpush1.bf16.msra.mxu0 0
    %2433 = vmatprep.subr.bf16.mxu0 0
    %2434 = vmatpush1.bf16.msra.mxu0 0
    %2435 = vmatprep.mubr.bf16.mxu0 0
    %2436 = vmatmul.mubr.bf16.gmra.mrb[0].mxu0 %v2401
    %v2437 = vpop.f32.mrb[0].mxu0
    %v2438 = vadd.f32 %v2226, %v2437
    %v2439 = vpop.f32.mrb[0].mxu0
    %v2440 = vadd.f32 %v2228, %v2439
    %v2441 = vpop.f32.mrb[0].mxu0
    %v2442 = vpop.f32.mrb[0].mxu0
    %2443 = vdwg.mxu0
    %v2444 = vadd.f32 %v2438, %v2394
    %v2445 = vadd.f32 %v2440, %v2396
    %2446 = vst [vmem:[#allocation8] sm:$0xff] %v2444
    %2447 = vst [vmem:[#allocation8 + $0x8] sm:$0xff] %v2445
    // Predicated region
    $region42: #{tpu_custom_call.1} parent=1 // pred_check
      _
    $region43: #{tpu_custom_call.1} parent=1 // pred_check_branch
      %2449 = sbr.rel (0) target = $region45
    $region44: #{tpu_custom_call.1} parent=1 // pred_region
      %s2451 = ssub.s32 256, 256
      %2452 = vsyncadd [#allocation6], %s2451
      %s2454 = sshll.u32 [#allocation8], 4
      %s2455 = int_to_ptr.vmem [resolvable:$true] %s2454
      %2457 = dma.vmem_to_hbm [thread:$0]  %s2455, 256, %s8, [#allocation6]
    $region45: #{tpu_custom_call.1} parent=1 // pred_fallthru
      _
    // Predicated region
    $region46: #{tpu_custom_call.1} parent=1 // pred_check
      _
    $region47: #{tpu_custom_call.1} parent=1 // pred_check_branch
      %2459 = sbr.rel (0) target = $region49
    $region48: #{tpu_custom_call.1} parent=1 // pred_region
      %2460 = dma.done [#allocation6], 256
    $region49: #{tpu_custom_call.1} parent=1 // pred_fallthru
      _
    %2461 = vsyncpa [#allocation6], 1
    %2462 = vsyncpa [#allocation7], 1

</llo_original>
